<compile_context>
chip_gen: v6e
topology: v6e:2x2x1
jax: 0.10.0
libtpu: 0.0.40
codegen_flags: <defaults>
</compile_context>

<pallas_src>
import jax
import jax.numpy as jnp
from jax.experimental import pallas as pl
from jax.experimental.pallas import tpu as pltpu


# ----------------------------------------------------------------------------
# Fused kernel: CNN stub + (folded) embedding/fc_input + LSTM + final fc
# ----------------------------------------------------------------------------
def captioning_fused_kernel(
    patch_ref, wc_ref, bc_ref, pool_ref,        # conv stub + MXU global-avg-pool matrix
    wfg_ref, bfg_ref,                           # folded feature->gate table / bias
    cap_ref, efold_ref,                         # captions + folded embedding->gate table
    whh_ref, wfc_ref, bfc_ref,                  # LSTM recurrence + final vocab fc
    out_ref,                                    # (T*B, V) logits, time-major rows (t*B + b)
):
    B = pool_ref.shape[0]
    TB = cap_ref.shape[0]
    T = TB // B
    V = efold_ref.shape[0]
    H = whh_ref.shape[0]

    # ---- 1) CNN feature stub: one im2col matmul + ReLU; GAP as a tiny MXU matmul.
    conv = jnp.dot(patch_ref[...], wc_ref[...],
                   preferred_element_type=jnp.float32) + bc_ref[...]              # (B*HW, Cm)
    conv = jnp.maximum(conv, 0.0)
    pooled = jnp.dot(pool_ref[...], conv, preferred_element_type=jnp.float32)     # (B, Cm)

    # ---- 2) folded projections: feature path -> per-batch gate bias; embedding -> gates_x.
    gate_bias = jnp.dot(pooled, wfg_ref[...],
                        preferred_element_type=jnp.float32) + bfg_ref[...]        # (B, 4H)

    iota = jax.lax.broadcasted_iota(jnp.int32, (TB, V), 1)
    onehot = (iota == cap_ref[...]).astype(jnp.float32)                           # (T*B, V)
    gates_x = jnp.dot(onehot, efold_ref[...], preferred_element_type=jnp.float32) # (T*B, 4H)

    # hoist the time-invariant bias add out of the recurrence (rows are time-major: t*B + b)
    gates_pre = gates_x + jnp.concatenate([gate_bias] * T, axis=0)                # (T*B, 4H)

    # ---- 3) LSTM recurrence (zero init state); gate columns pre-permuted to (i, f, o, g).
    whh = whh_ref[...]
    h = jnp.zeros((B, H), jnp.float32)
    c = jnp.zeros((B, H), jnp.float32)
    hs = []
    for t in range(T):                           # T static -> fully unrolled, all-static slices
        g = gates_pre[t * B:(t + 1) * B, :] + jnp.dot(h, whh,
                                                      preferred_element_type=jnp.float32)
        sig = jax.nn.sigmoid(g[:, :3 * H])       # one contiguous sigmoid slice (i, f, o)
        i_g = sig[:, 0:H]
        f_g = sig[:, H:2 * H]
        o_g = sig[:, 2 * H:3 * H]
        g_g = jnp.tanh(g[:, 3 * H:])
        c = f_g * c + i_g * g_g
        h = o_g * jnp.tanh(c)
        hs.append(h)                             # stays in vregs (no scratch stores)

    # ---- 4) final vocab projection: one (T*B, H) @ (H, V) matmul, single lane-dense store.
    hs_tm = jnp.concatenate(hs, axis=0)                                            # (T*B, H)
    out_ref[...] = jnp.dot(hs_tm, wfc_ref[...],
                           preferred_element_type=jnp.float32) + bfc_ref[...]


# ----------------------------------------------------------------------------
# Wrapper
# ----------------------------------------------------------------------------
def im2col_3x3_same(images_nchw, k_pad):
    x = jnp.transpose(images_nchw, (0, 2, 3, 1))         # NCHW -> NHWC
    B, H, W, C = x.shape
    xp = jnp.pad(x, ((0, 0), (1, 1), (1, 1), (0, 0)))
    cols = [xp[:, di:di + H, dj:dj + W, :] for di in range(3) for dj in range(3)]
    p = jnp.stack(cols, axis=3).reshape(B, H * W, 9 * C)
    if k_pad > 9 * C:                                     # pad K to a lane-friendly width
        p = jnp.pad(p, ((0, 0), (0, 0), (0, k_pad - 9 * C)))
    return p


def image_captioning_forward(params, images_nchw, captions):
    B = images_nchw.shape[0]
    T = captions.shape[1]
    V = params["e_fold"].shape[0]
    k_pad = params["wc"].shape[0]

    patches = im2col_3x3_same(images_nchw, k_pad)                         # (B, HW, k_pad)
    HW = patches.shape[1]
    patches = patches.reshape(B * HW, k_pad).astype(params["wc"].dtype)   # bf16 conv operand

    # per-batch mean over the HW conv rows, evaluated on the MXU inside the kernel
    pool_mat = jnp.repeat(jnp.eye(B, dtype=jnp.float32), HW, axis=1) / float(HW)   # (B, B*HW)

    cap_tm = jnp.transpose(captions.astype(jnp.int32)).reshape(T * B, 1)  # time-major rows (t*B + b)

    inputs = (
        patches, params["wc"], params["bc"], pool_mat,
        params["w_featgate"], params["b_featgate"],
        cap_tm, params["e_fold"],
        params["w_hh"], params["w_fc"], params["b_fc"],
    )

    vmem = pltpu.MemorySpace.VMEM
    logits_tm = pl.pallas_call(
        captioning_fused_kernel,
        out_shape=jax.ShapeDtypeStruct((T * B, V), jnp.float32),
        in_specs=[pl.BlockSpec(memory_space=vmem) for _ in inputs],
        out_specs=pl.BlockSpec(memory_space=vmem),
    )(*inputs)

    # rows are time-major (t*B + b); the (B,T,V) fix-up is one trivial 8 KB XLA transpose
    return jnp.transpose(logits_tm.reshape(T, B, V), (1, 0, 2))


# ----------------------------------------------------------------------------
# Deterministic synthetic parameters (shapes from __init__) + offline folding
# ----------------------------------------------------------------------------
def init_params(key, *, cin=3, cmid=128, feat=512, vocab=128, emb=32, hidden=32):
    ks = jax.random.split(key, 11)

    def nrm(k, shape, scale):
        return (scale * jax.random.normal(k, shape)).astype(jnp.float32)

    return dict(
        # CNN stub (stand-in for the ResNet18 feature extractor -> 512-d); cmid=128 for lane density
        wc=nrm(ks[0], (9 * cin, cmid), 0.10),
        bc=jnp.zeros((1, cmid), jnp.float32),
        wp=nrm(ks[1], (cmid, feat), 0.10),
        bp=nrm(ks[2], (1, feat), 0.01),
        # nn.Embedding(vocab_size, embedding_dim)
        emb=nrm(ks[3], (vocab, emb), 0.10),
        # nn.Linear(512 + embedding_dim, embedding_dim)  (stored transposed: (in, out))
        w_fc_input=nrm(ks[4], (feat + emb, emb), 0.05),
        b_fc_input=nrm(ks[5], (1, emb), 0.01),
        # nn.LSTM(embedding_dim, hidden_dim), PyTorch gate order (i,f,g,o); b = b_ih + b_hh
        w_ih=nrm(ks[6], (emb, 4 * hidden), 0.10),
        w_hh=nrm(ks[7], (hidden, 4 * hidden), 0.10),
        b_lstm=nrm(ks[8], (1, 4 * hidden), 0.01),
        # nn.Linear(hidden_dim, vocab_size)  (stored transposed)
        w_fc=nrm(ks[9], (hidden, vocab), 0.10),
        b_fc=nrm(ks[10], (1, vocab), 0.01),
    )


def _permute_gate_cols(w, H):
    # PyTorch LSTM gate order (i, f, g, o) -> kernel order (i, f, o, g)
    return jnp.concatenate(
        [w[..., 0:H], w[..., H:2 * H], w[..., 3 * H:4 * H], w[..., 2 * H:3 * H]], axis=-1)


def prepare_params(raw, *, feat_dim, k_pad=32):
    """One-time (outside jit) weight prep: pad conv K, permute gates, and fold the
    feature / embedding paths through fc_input and W_ih (exact by associativity)."""
    H = raw["w_hh"].shape[0]

    w_ih = _permute_gate_cols(raw["w_ih"], H)       # (E, 4H)
    w_hh = _permute_gate_cols(raw["w_hh"], H)       # (H, 4H)
    b_lstm = _permute_gate_cols(raw["b_lstm"], H)   # (1, 4H)

    wc = raw["wc"]
    k_in = wc.shape[0]
    if k_pad > k_in:                                # extra rows hit zero-padded patch columns
        wc = jnp.pad(wc, ((0, k_pad - k_in), (0, 0)))

    # torch.cat((features, embeddings), dim=2): rows [0:512] of fc_input hit the feature, rest the embedding
    w1a = raw["w_fc_input"][:feat_dim, :]           # (feat, E)
    w1b = raw["w_fc_input"][feat_dim:, :]           # (E, E)

    # feature path fold:   gate_bias = pooled @ (wp @ w1a @ W_ih) + ((bp @ w1a + b1) @ W_ih + b)
    w_featgate = raw["wp"] @ w1a @ w_ih                                            # (cmid, 4H)
    b_featgate = (raw["bp"] @ w1a + raw["b_fc_input"]) @ w_ih + b_lstm             # (1, 4H)
    # embedding path fold: gates_x   = onehot @ (emb @ w1b @ W_ih)
    e_fold = raw["emb"] @ w1b @ w_ih                                               # (V, 4H)

    return dict(
        wc=wc.astype(jnp.bfloat16),                 # bf16 conv operand (f32 accumulate in-kernel)
        bc=raw["bc"],
        w_featgate=w_featgate,
        b_featgate=b_featgate,
        e_fold=e_fold,
        w_hh=w_hh,
        w_fc=raw["w_fc"],
        b_fc=raw["b_fc"],
    )


if __name__ == "__main__":
    B, C, IMG, T = 2, 3, 16, 8
    VOCAB, EMB, HID, FEAT = 128, 32, 32, 512

    key = jax.random.PRNGKey(0)
    k_img, k_cap, k_par = jax.random.split(key, 3)

    images = jax.random.normal(k_img, (B, C, IMG, IMG), dtype=jnp.float32)   # NCHW, like PyTorch
    captions = jax.random.randint(k_cap, (B, T), 0, VOCAB, dtype=jnp.int32)
    params = prepare_params(
        init_params(k_par, cin=C, cmid=128, feat=FEAT, vocab=VOCAB, emb=EMB, hidden=HID),
        feat_dim=FEAT, k_pad=32)

    logits = jax.jit(image_captioning_forward)(params, images, captions)
    logits = jax.block_until_ready(logits)
    assert logits.shape == (B, T, VOCAB) and logits.dtype == jnp.float32
    print("KERNEL_OK")
</pallas_src>

<mosaic_0001>
module attributes {stable_mosaic.version = 11 : i64} {
  func.func @captioning_fused_kernel(%arg0: memref<512x32xbf16, #tpu.memory_space<vmem>>, %arg1: memref<32x128xbf16, #tpu.memory_space<vmem>>, %arg2: memref<1x128xf32, #tpu.memory_space<vmem>>, %arg3: memref<2x512xf32, #tpu.memory_space<vmem>>, %arg4: memref<128x128xf32, #tpu.memory_space<vmem>>, %arg5: memref<1x128xf32, #tpu.memory_space<vmem>>, %arg6: memref<16x1xi32, #tpu.memory_space<vmem>>, %arg7: memref<128x128xf32, #tpu.memory_space<vmem>>, %arg8: memref<32x128xf32, #tpu.memory_space<vmem>>, %arg9: memref<32x128xf32, #tpu.memory_space<vmem>>, %arg10: memref<1x128xf32, #tpu.memory_space<vmem>>, %arg11: memref<16x128xf32, #tpu.memory_space<vmem>>) attributes {dimension_semantics = [], scalar_prefetch = 0 : i64, scratch_operands = 0 : i64, tpu.core_type = #tpu.core_type<tc>} {
    %c0 = arith.constant 0 : index
    %c0_0 = arith.constant 0 : index
    %0 = vector.load %arg0[%c0, %c0_0] : memref<512x32xbf16, #tpu.memory_space<vmem>>, vector<512x32xbf16>
    %c0_1 = arith.constant 0 : index
    %c0_2 = arith.constant 0 : index
    %1 = vector.load %arg1[%c0_1, %c0_2] : memref<32x128xbf16, #tpu.memory_space<vmem>>, vector<32x128xbf16>
    %cst = arith.constant dense<0.000000e+00> : vector<512x128xf32>
    %2 = tpu.matmul %0, %1, %cst {dimension_numbers = #tpu.dot_dimension_numbers<[1], [0], [0], [1], [0, 0, 1, 1], [], []>} : vector<512x32xbf16>, vector<32x128xbf16>, vector<512x128xf32> -> vector<512x128xf32>
    %c0_3 = arith.constant 0 : index
    %c0_4 = arith.constant 0 : index
    %3 = vector.load %arg2[%c0_3, %c0_4] : memref<1x128xf32, #tpu.memory_space<vmem>>, vector<1x128xf32>
    %4 = vector.broadcast %3 : vector<1x128xf32> to vector<512x128xf32>
    %5 = arith.addf %2, %4 : vector<512x128xf32>
    %cst_5 = arith.constant 0.000000e+00 : f32
    %6 = vector.broadcast %cst_5 : f32 to vector<512x128xf32>
    %7 = arith.maximumf %5, %6 : vector<512x128xf32>
    %c0_6 = arith.constant 0 : index
    %c0_7 = arith.constant 0 : index
    %8 = vector.load %arg3[%c0_6, %c0_7] : memref<2x512xf32, #tpu.memory_space<vmem>>, vector<2x512xf32>
    %cst_8 = arith.constant dense<0.000000e+00> : vector<2x128xf32>
    %9 = tpu.matmul %8, %7, %cst_8 {dimension_numbers = #tpu.dot_dimension_numbers<[1], [0], [0], [1], [0, 0, 1, 1], [], []>} : vector<2x512xf32>, vector<512x128xf32>, vector<2x128xf32> -> vector<2x128xf32>
    %c0_9 = arith.constant 0 : index
    %c0_10 = arith.constant 0 : index
    %10 = vector.load %arg4[%c0_9, %c0_10] : memref<128x128xf32, #tpu.memory_space<vmem>>, vector<128x128xf32>
    %cst_11 = arith.constant dense<0.000000e+00> : vector<2x128xf32>
    %11 = tpu.matmul %9, %10, %cst_11 {dimension_numbers = #tpu.dot_dimension_numbers<[1], [0], [0], [1], [0, 0, 1, 1], [], []>} : vector<2x128xf32>, vector<128x128xf32>, vector<2x128xf32> -> vector<2x128xf32>
    %c0_12 = arith.constant 0 : index
    %c0_13 = arith.constant 0 : index
    %12 = vector.load %arg5[%c0_12, %c0_13] : memref<1x128xf32, #tpu.memory_space<vmem>>, vector<1x128xf32>
    %13 = vector.broadcast %12 : vector<1x128xf32> to vector<2x128xf32>
    %14 = arith.addf %11, %13 : vector<2x128xf32>
    %15 = tpu.iota {dimensions = array<i32: 1>} : vector<16x128xi32>
    %c0_14 = arith.constant 0 : index
    %c0_15 = arith.constant 0 : index
    %16 = vector.load %arg6[%c0_14, %c0_15] : memref<16x1xi32, #tpu.memory_space<vmem>>, vector<16x1xi32>
    %17 = vector.broadcast %16 : vector<16x1xi32> to vector<16x128xi32>
    %18 = arith.cmpi eq, %15, %17 : vector<16x128xi32>
    %19 = arith.extui %18 : vector<16x128xi1> to vector<16x128xi32>
    %20 = arith.sitofp %19 : vector<16x128xi32> to vector<16x128xf32>
    %c0_16 = arith.constant 0 : index
    %c0_17 = arith.constant 0 : index
    %21 = vector.load %arg7[%c0_16, %c0_17] : memref<128x128xf32, #tpu.memory_space<vmem>>, vector<128x128xf32>
    %cst_18 = arith.constant dense<0.000000e+00> : vector<16x128xf32>
    %22 = tpu.matmul %20, %21, %cst_18 {dimension_numbers = #tpu.dot_dimension_numbers<[1], [0], [0], [1], [0, 0, 1, 1], [], []>} : vector<16x128xf32>, vector<128x128xf32>, vector<16x128xf32> -> vector<16x128xf32>
    %23 = tpu.concatenate %14, %14, %14, %14, %14, %14, %14, %14 in 0 : vector<2x128xf32>, vector<2x128xf32>, vector<2x128xf32>, vector<2x128xf32>, vector<2x128xf32>, vector<2x128xf32>, vector<2x128xf32>, vector<2x128xf32> -> vector<16x128xf32>
    %24 = arith.addf %22, %23 : vector<16x128xf32>
    %c0_19 = arith.constant 0 : index
    %c0_20 = arith.constant 0 : index
    %25 = vector.load %arg8[%c0_19, %c0_20] : memref<32x128xf32, #tpu.memory_space<vmem>>, vector<32x128xf32>
    %cst_21 = arith.constant 0.000000e+00 : f32
    %26 = vector.broadcast %cst_21 : f32 to vector<2x32xf32>
    %cst_22 = arith.constant 0.000000e+00 : f32
    %27 = vector.broadcast %cst_22 : f32 to vector<2x32xf32>
    %28 = vector.extract_strided_slice %24 {offsets = [0, 0], sizes = [2, 128], strides = [1, 1]} : vector<16x128xf32> to vector<2x128xf32>
    %cst_23 = arith.constant dense<0.000000e+00> : vector<2x128xf32>
    %29 = tpu.matmul %26, %25, %cst_23 {dimension_numbers = #tpu.dot_dimension_numbers<[1], [0], [0], [1], [0, 0, 1, 1], [], []>} : vector<2x32xf32>, vector<32x128xf32>, vector<2x128xf32> -> vector<2x128xf32>
    %30 = arith.addf %28, %29 : vector<2x128xf32>
    %31 = vector.extract_strided_slice %30 {offsets = [0, 0], sizes = [2, 96], strides = [1, 1]} : vector<2x128xf32> to vector<2x96xf32>
    %32 = arith.negf %31 : vector<2x96xf32>
    %33 = math.exp %32 : vector<2x96xf32>
    %cst_24 = arith.constant 1.000000e+00 : f32
    %34 = vector.broadcast %cst_24 : f32 to vector<2x96xf32>
    %35 = arith.addf %34, %33 : vector<2x96xf32>
    %36 = arith.divf %34, %35 : vector<2x96xf32>
    %37 = vector.extract_strided_slice %36 {offsets = [0, 0], sizes = [2, 32], strides = [1, 1]} : vector<2x96xf32> to vector<2x32xf32>
    %38 = vector.extract_strided_slice %36 {offsets = [0, 32], sizes = [2, 32], strides = [1, 1]} : vector<2x96xf32> to vector<2x32xf32>
    %39 = vector.extract_strided_slice %36 {offsets = [0, 64], sizes = [2, 32], strides = [1, 1]} : vector<2x96xf32> to vector<2x32xf32>
    %40 = vector.extract_strided_slice %30 {offsets = [0, 96], sizes = [2, 32], strides = [1, 1]} : vector<2x128xf32> to vector<2x32xf32>
    %41 = math.tanh %40 : vector<2x32xf32>
    %42 = arith.mulf %38, %27 : vector<2x32xf32>
    %43 = arith.mulf %37, %41 : vector<2x32xf32>
    %44 = arith.addf %42, %43 : vector<2x32xf32>
    %45 = math.tanh %44 : vector<2x32xf32>
    %46 = arith.mulf %39, %45 : vector<2x32xf32>
    %47 = vector.extract_strided_slice %24 {offsets = [2, 0], sizes = [2, 128], strides = [1, 1]} : vector<16x128xf32> to vector<2x128xf32>
    %cst_25 = arith.constant dense<0.000000e+00> : vector<2x128xf32>
    %48 = tpu.matmul %46, %25, %cst_25 {dimension_numbers = #tpu.dot_dimension_numbers<[1], [0], [0], [1], [0, 0, 1, 1], [], []>} : vector<2x32xf32>, vector<32x128xf32>, vector<2x128xf32> -> vector<2x128xf32>
    %49 = arith.addf %47, %48 : vector<2x128xf32>
    %50 = vector.extract_strided_slice %49 {offsets = [0, 0], sizes = [2, 96], strides = [1, 1]} : vector<2x128xf32> to vector<2x96xf32>
    %51 = arith.negf %50 : vector<2x96xf32>
    %52 = math.exp %51 : vector<2x96xf32>
    %cst_26 = arith.constant 1.000000e+00 : f32
    %53 = vector.broadcast %cst_26 : f32 to vector<2x96xf32>
    %54 = arith.addf %53, %52 : vector<2x96xf32>
    %55 = arith.divf %53, %54 : vector<2x96xf32>
    %56 = vector.extract_strided_slice %55 {offsets = [0, 0], sizes = [2, 32], strides = [1, 1]} : vector<2x96xf32> to vector<2x32xf32>
    %57 = vector.extract_strided_slice %55 {offsets = [0, 32], sizes = [2, 32], strides = [1, 1]} : vector<2x96xf32> to vector<2x32xf32>
    %58 = vector.extract_strided_slice %55 {offsets = [0, 64], sizes = [2, 32], strides = [1, 1]} : vector<2x96xf32> to vector<2x32xf32>
    %59 = vector.extract_strided_slice %49 {offsets = [0, 96], sizes = [2, 32], strides = [1, 1]} : vector<2x128xf32> to vector<2x32xf32>
    %60 = math.tanh %59 : vector<2x32xf32>
    %61 = arith.mulf %57, %44 : vector<2x32xf32>
    %62 = arith.mulf %56, %60 : vector<2x32xf32>
    %63 = arith.addf %61, %62 : vector<2x32xf32>
    %64 = math.tanh %63 : vector<2x32xf32>
    %65 = arith.mulf %58, %64 : vector<2x32xf32>
    %66 = vector.extract_strided_slice %24 {offsets = [4, 0], sizes = [2, 128], strides = [1, 1]} : vector<16x128xf32> to vector<2x128xf32>
    %cst_27 = arith.constant dense<0.000000e+00> : vector<2x128xf32>
    %67 = tpu.matmul %65, %25, %cst_27 {dimension_numbers = #tpu.dot_dimension_numbers<[1], [0], [0], [1], [0, 0, 1, 1], [], []>} : vector<2x32xf32>, vector<32x128xf32>, vector<2x128xf32> -> vector<2x128xf32>
    %68 = arith.addf %66, %67 : vector<2x128xf32>
    %69 = vector.extract_strided_slice %68 {offsets = [0, 0], sizes = [2, 96], strides = [1, 1]} : vector<2x128xf32> to vector<2x96xf32>
    %70 = arith.negf %69 : vector<2x96xf32>
    %71 = math.exp %70 : vector<2x96xf32>
    %cst_28 = arith.constant 1.000000e+00 : f32
    %72 = vector.broadcast %cst_28 : f32 to vector<2x96xf32>
    %73 = arith.addf %72, %71 : vector<2x96xf32>
    %74 = arith.divf %72, %73 : vector<2x96xf32>
    %75 = vector.extract_strided_slice %74 {offsets = [0, 0], sizes = [2, 32], strides = [1, 1]} : vector<2x96xf32> to vector<2x32xf32>
    %76 = vector.extract_strided_slice %74 {offsets = [0, 32], sizes = [2, 32], strides = [1, 1]} : vector<2x96xf32> to vector<2x32xf32>
    %77 = vector.extract_strided_slice %74 {offsets = [0, 64], sizes = [2, 32], strides = [1, 1]} : vector<2x96xf32> to vector<2x32xf32>
    %78 = vector.extract_strided_slice %68 {offsets = [0, 96], sizes = [2, 32], strides = [1, 1]} : vector<2x128xf32> to vector<2x32xf32>
    %79 = math.tanh %78 : vector<2x32xf32>
    %80 = arith.mulf %76, %63 : vector<2x32xf32>
    %81 = arith.mulf %75, %79 : vector<2x32xf32>
    %82 = arith.addf %80, %81 : vector<2x32xf32>
    %83 = math.tanh %82 : vector<2x32xf32>
    %84 = arith.mulf %77, %83 : vector<2x32xf32>
    %85 = vector.extract_strided_slice %24 {offsets = [6, 0], sizes = [2, 128], strides = [1, 1]} : vector<16x128xf32> to vector<2x128xf32>
    %cst_29 = arith.constant dense<0.000000e+00> : vector<2x128xf32>
    %86 = tpu.matmul %84, %25, %cst_29 {dimension_numbers = #tpu.dot_dimension_numbers<[1], [0], [0], [1], [0, 0, 1, 1], [], []>} : vector<2x32xf32>, vector<32x128xf32>, vector<2x128xf32> -> vector<2x128xf32>
    %87 = arith.addf %85, %86 : vector<2x128xf32>
    %88 = vector.extract_strided_slice %87 {offsets = [0, 0], sizes = [2, 96], strides = [1, 1]} : vector<2x128xf32> to vector<2x96xf32>
    %89 = arith.negf %88 : vector<2x96xf32>
    %90 = math.exp %89 : vector<2x96xf32>
    %cst_30 = arith.constant 1.000000e+00 : f32
    %91 = vector.broadcast %cst_30 : f32 to vector<2x96xf32>
    %92 = arith.addf %91, %90 : vector<2x96xf32>
    %93 = arith.divf %91, %92 : vector<2x96xf32>
    %94 = vector.extract_strided_slice %93 {offsets = [0, 0], sizes = [2, 32], strides = [1, 1]} : vector<2x96xf32> to vector<2x32xf32>
    %95 = vector.extract_strided_slice %93 {offsets = [0, 32], sizes = [2, 32], strides = [1, 1]} : vector<2x96xf32> to vector<2x32xf32>
    %96 = vector.extract_strided_slice %93 {offsets = [0, 64], sizes = [2, 32], strides = [1, 1]} : vector<2x96xf32> to vector<2x32xf32>
    %97 = vector.extract_strided_slice %87 {offsets = [0, 96], sizes = [2, 32], strides = [1, 1]} : vector<2x128xf32> to vector<2x32xf32>
    %98 = math.tanh %97 : vector<2x32xf32>
    %99 = arith.mulf %95, %82 : vector<2x32xf32>
    %100 = arith.mulf %94, %98 : vector<2x32xf32>
    %101 = arith.addf %99, %100 : vector<2x32xf32>
    %102 = math.tanh %101 : vector<2x32xf32>
    %103 = arith.mulf %96, %102 : vector<2x32xf32>
    %104 = vector.extract_strided_slice %24 {offsets = [8, 0], sizes = [2, 128], strides = [1, 1]} : vector<16x128xf32> to vector<2x128xf32>
    %cst_31 = arith.constant dense<0.000000e+00> : vector<2x128xf32>
    %105 = tpu.matmul %103, %25, %cst_31 {dimension_numbers = #tpu.dot_dimension_numbers<[1], [0], [0], [1], [0, 0, 1, 1], [], []>} : vector<2x32xf32>, vector<32x128xf32>, vector<2x128xf32> -> vector<2x128xf32>
    %106 = arith.addf %104, %105 : vector<2x128xf32>
    %107 = vector.extract_strided_slice %106 {offsets = [0, 0], sizes = [2, 96], strides = [1, 1]} : vector<2x128xf32> to vector<2x96xf32>
    %108 = arith.negf %107 : vector<2x96xf32>
    %109 = math.exp %108 : vector<2x96xf32>
    %cst_32 = arith.constant 1.000000e+00 : f32
    %110 = vector.broadcast %cst_32 : f32 to vector<2x96xf32>
    %111 = arith.addf %110, %109 : vector<2x96xf32>
    %112 = arith.divf %110, %111 : vector<2x96xf32>
    %113 = vector.extract_strided_slice %112 {offsets = [0, 0], sizes = [2, 32], strides = [1, 1]} : vector<2x96xf32> to vector<2x32xf32>
    %114 = vector.extract_strided_slice %112 {offsets = [0, 32], sizes = [2, 32], strides = [1, 1]} : vector<2x96xf32> to vector<2x32xf32>
    %115 = vector.extract_strided_slice %112 {offsets = [0, 64], sizes = [2, 32], strides = [1, 1]} : vector<2x96xf32> to vector<2x32xf32>
    %116 = vector.extract_strided_slice %106 {offsets = [0, 96], sizes = [2, 32], strides = [1, 1]} : vector<2x128xf32> to vector<2x32xf32>
    %117 = math.tanh %116 : vector<2x32xf32>
    %118 = arith.mulf %114, %101 : vector<2x32xf32>
    %119 = arith.mulf %113, %117 : vector<2x32xf32>
    %120 = arith.addf %118, %119 : vector<2x32xf32>
    %121 = math.tanh %120 : vector<2x32xf32>
    %122 = arith.mulf %115, %121 : vector<2x32xf32>
    %123 = vector.extract_strided_slice %24 {offsets = [10, 0], sizes = [2, 128], strides = [1, 1]} : vector<16x128xf32> to vector<2x128xf32>
    %cst_33 = arith.constant dense<0.000000e+00> : vector<2x128xf32>
    %124 = tpu.matmul %122, %25, %cst_33 {dimension_numbers = #tpu.dot_dimension_numbers<[1], [0], [0], [1], [0, 0, 1, 1], [], []>} : vector<2x32xf32>, vector<32x128xf32>, vector<2x128xf32> -> vector<2x128xf32>
    %125 = arith.addf %123, %124 : vector<2x128xf32>
    %126 = vector.extract_strided_slice %125 {offsets = [0, 0], sizes = [2, 96], strides = [1, 1]} : vector<2x128xf32> to vector<2x96xf32>
    %127 = arith.negf %126 : vector<2x96xf32>
    %128 = math.exp %127 : vector<2x96xf32>
    %cst_34 = arith.constant 1.000000e+00 : f32
    %129 = vector.broadcast %cst_34 : f32 to vector<2x96xf32>
    %130 = arith.addf %129, %128 : vector<2x96xf32>
    %131 = arith.divf %129, %130 : vector<2x96xf32>
    %132 = vector.extract_strided_slice %131 {offsets = [0, 0], sizes = [2, 32], strides = [1, 1]} : vector<2x96xf32> to vector<2x32xf32>
    %133 = vector.extract_strided_slice %131 {offsets = [0, 32], sizes = [2, 32], strides = [1, 1]} : vector<2x96xf32> to vector<2x32xf32>
    %134 = vector.extract_strided_slice %131 {offsets = [0, 64], sizes = [2, 32], strides = [1, 1]} : vector<2x96xf32> to vector<2x32xf32>
    %135 = vector.extract_strided_slice %125 {offsets = [0, 96], sizes = [2, 32], strides = [1, 1]} : vector<2x128xf32> to vector<2x32xf32>
    %136 = math.tanh %135 : vector<2x32xf32>
    %137 = arith.mulf %133, %120 : vector<2x32xf32>
    %138 = arith.mulf %132, %136 : vector<2x32xf32>
    %139 = arith.addf %137, %138 : vector<2x32xf32>
    %140 = math.tanh %139 : vector<2x32xf32>
    %141 = arith.mulf %134, %140 : vector<2x32xf32>
    %142 = vector.extract_strided_slice %24 {offsets = [12, 0], sizes = [2, 128], strides = [1, 1]} : vector<16x128xf32> to vector<2x128xf32>
    %cst_35 = arith.constant dense<0.000000e+00> : vector<2x128xf32>
    %143 = tpu.matmul %141, %25, %cst_35 {dimension_numbers = #tpu.dot_dimension_numbers<[1], [0], [0], [1], [0, 0, 1, 1], [], []>} : vector<2x32xf32>, vector<32x128xf32>, vector<2x128xf32> -> vector<2x128xf32>
    %144 = arith.addf %142, %143 : vector<2x128xf32>
    %145 = vector.extract_strided_slice %144 {offsets = [0, 0], sizes = [2, 96], strides = [1, 1]} : vector<2x128xf32> to vector<2x96xf32>
    %146 = arith.negf %145 : vector<2x96xf32>
    %147 = math.exp %146 : vector<2x96xf32>
    %cst_36 = arith.constant 1.000000e+00 : f32
    %148 = vector.broadcast %cst_36 : f32 to vector<2x96xf32>
    %149 = arith.addf %148, %147 : vector<2x96xf32>
    %150 = arith.divf %148, %149 : vector<2x96xf32>
    %151 = vector.extract_strided_slice %150 {offsets = [0, 0], sizes = [2, 32], strides = [1, 1]} : vector<2x96xf32> to vector<2x32xf32>
    %152 = vector.extract_strided_slice %150 {offsets = [0, 32], sizes = [2, 32], strides = [1, 1]} : vector<2x96xf32> to vector<2x32xf32>
    %153 = vector.extract_strided_slice %150 {offsets = [0, 64], sizes = [2, 32], strides = [1, 1]} : vector<2x96xf32> to vector<2x32xf32>
    %154 = vector.extract_strided_slice %144 {offsets = [0, 96], sizes = [2, 32], strides = [1, 1]} : vector<2x128xf32> to vector<2x32xf32>
    %155 = math.tanh %154 : vector<2x32xf32>
    %156 = arith.mulf %152, %139 : vector<2x32xf32>
    %157 = arith.mulf %151, %155 : vector<2x32xf32>
    %158 = arith.addf %156, %157 : vector<2x32xf32>
    %159 = math.tanh %158 : vector<2x32xf32>
    %160 = arith.mulf %153, %159 : vector<2x32xf32>
    %161 = vector.extract_strided_slice %24 {offsets = [14, 0], sizes = [2, 128], strides = [1, 1]} : vector<16x128xf32> to vector<2x128xf32>
    %cst_37 = arith.constant dense<0.000000e+00> : vector<2x128xf32>
    %162 = tpu.matmul %160, %25, %cst_37 {dimension_numbers = #tpu.dot_dimension_numbers<[1], [0], [0], [1], [0, 0, 1, 1], [], []>} : vector<2x32xf32>, vector<32x128xf32>, vector<2x128xf32> -> vector<2x128xf32>
    %163 = arith.addf %161, %162 : vector<2x128xf32>
    %164 = vector.extract_strided_slice %163 {offsets = [0, 0], sizes = [2, 96], strides = [1, 1]} : vector<2x128xf32> to vector<2x96xf32>
    %165 = arith.negf %164 : vector<2x96xf32>
    %166 = math.exp %165 : vector<2x96xf32>
    %cst_38 = arith.constant 1.000000e+00 : f32
    %167 = vector.broadcast %cst_38 : f32 to vector<2x96xf32>
    %168 = arith.addf %167, %166 : vector<2x96xf32>
    %169 = arith.divf %167, %168 : vector<2x96xf32>
    %170 = vector.extract_strided_slice %169 {offsets = [0, 0], sizes = [2, 32], strides = [1, 1]} : vector<2x96xf32> to vector<2x32xf32>
    %171 = vector.extract_strided_slice %169 {offsets = [0, 32], sizes = [2, 32], strides = [1, 1]} : vector<2x96xf32> to vector<2x32xf32>
    %172 = vector.extract_strided_slice %169 {offsets = [0, 64], sizes = [2, 32], strides = [1, 1]} : vector<2x96xf32> to vector<2x32xf32>
    %173 = vector.extract_strided_slice %163 {offsets = [0, 96], sizes = [2, 32], strides = [1, 1]} : vector<2x128xf32> to vector<2x32xf32>
    %174 = math.tanh %173 : vector<2x32xf32>
    %175 = arith.mulf %171, %158 : vector<2x32xf32>
    %176 = arith.mulf %170, %174 : vector<2x32xf32>
    %177 = arith.addf %175, %176 : vector<2x32xf32>
    %178 = math.tanh %177 : vector<2x32xf32>
    %179 = arith.mulf %172, %178 : vector<2x32xf32>
    %180 = tpu.concatenate %46, %65, %84, %103, %122, %141, %160, %179 in 0 : vector<2x32xf32>, vector<2x32xf32>, vector<2x32xf32>, vector<2x32xf32>, vector<2x32xf32>, vector<2x32xf32>, vector<2x32xf32>, vector<2x32xf32> -> vector<16x32xf32>
    %c0_39 = arith.constant 0 : index
    %c0_40 = arith.constant 0 : index
    %181 = vector.load %arg9[%c0_39, %c0_40] : memref<32x128xf32, #tpu.memory_space<vmem>>, vector<32x128xf32>
    %cst_41 = arith.constant dense<0.000000e+00> : vector<16x128xf32>
    %182 = tpu.matmul %180, %181, %cst_41 {dimension_numbers = #tpu.dot_dimension_numbers<[1], [0], [0], [1], [0, 0, 1, 1], [], []>} : vector<16x32xf32>, vector<32x128xf32>, vector<16x128xf32> -> vector<16x128xf32>
    %c0_42 = arith.constant 0 : index
    %c0_43 = arith.constant 0 : index
    %183 = vector.load %arg10[%c0_42, %c0_43] : memref<1x128xf32, #tpu.memory_space<vmem>>, vector<1x128xf32>
    %184 = vector.broadcast %183 : vector<1x128xf32> to vector<16x128xf32>
    %185 = arith.addf %182, %184 : vector<16x128xf32>
    %c0_44 = arith.constant 0 : index
    %c0_45 = arith.constant 0 : index
    %186 = vector.load %arg11[%c0_44, %c0_45] : memref<16x128xf32, #tpu.memory_space<vmem>>, vector<16x128xf32>
    tpu.vector_store %arg11[%c0_44, %c0_45], %185 {strides = array<i32>} : memref<16x128xf32, #tpu.memory_space<vmem>>, vector<16x128xf32>,
    return
  }
}

</mosaic_0001>

<llo_original>
// kernel: image_captioning_forward.1
$region0: #{image_captioning_forward.1}
  #allocation0 [shape = 'u32[]', space=smem, size = 0x4, offset = 0x4, fixed_abs, tag = 'smem constant byte address 0x4 - core index']
  #allocation1 [shape = 'u32[144,128]{1,0:T(1,128)}', space=vmem, size = 0x12000, scoped, tag = 'internal scratch']
  %s0 = inlined_call_operand.vmem [shape: bf16[512,32], index: 0, kind: input, shape index: {}]
  %s1 = inlined_call_operand.vmem [shape: bf16[32,128], index: 1, kind: input, shape index: {}]
  %s2 = inlined_call_operand.vmem [shape: f32[1,128], index: 2, kind: input, shape index: {}]
  %s3 = inlined_call_operand.vmem [shape: f32[2,512], index: 3, kind: input, shape index: {}]
  %s4 = inlined_call_operand.vmem [shape: f32[128,128], index: 4, kind: input, shape index: {}]
  %s5 = inlined_call_operand.vmem [shape: f32[1,128], index: 5, kind: input, shape index: {}]
  %s6 = inlined_call_operand.vmem [shape: s32[16,1], index: 6, kind: input, shape index: {}]
  %s7 = inlined_call_operand.vmem [shape: f32[128,128], index: 7, kind: input, shape index: {}]
  %s8 = inlined_call_operand.vmem [shape: f32[32,128], index: 8, kind: input, shape index: {}]
  %s9 = inlined_call_operand.vmem [shape: f32[32,128], index: 9, kind: input, shape index: {}]
  %s10 = inlined_call_operand.vmem [shape: f32[1,128], index: 10, kind: input, shape index: {}]
  %s11 = inlined_call_operand.vmem [shape: f32[16,128], index: 11, kind: output, shape index: {}]
  %s12 = sld [smem:[#allocation0]]
  $region54: #{image_captioning_forward.1} parent=0
    _
  %s14 = ssub.s32 1, %s12
  %s15 = scalar_select 0, %s14, %s12
  // Predicated region
  $region2: #{image_captioning_forward.1} parent=0 // pred_check
    _
  $region3: #{image_captioning_forward.1} parent=0 // pred_check_branch
    %17 = sbr.rel (0) target = $region5
  $region4: #{image_captioning_forward.1} parent=0 // pred_region
    _
  $region5: #{image_captioning_forward.1} parent=0 // pred_fallthru
    _
  // Predicated region
  $region6: #{image_captioning_forward.1} parent=0 // pred_check
    _
  $region7: #{image_captioning_forward.1} parent=0 // pred_check_branch
    %19 = sbr.rel (0) target = $region9
  $region8: #{image_captioning_forward.1} parent=0 // pred_region
    _
  $region9: #{image_captioning_forward.1} parent=0 // pred_fallthru
    _
  // Predicated region
  $region10: #{image_captioning_forward.1} parent=0 // pred_check
    _
  $region11: #{image_captioning_forward.1} parent=0 // pred_check_branch
    %21 = sbr.rel (0) target = $region13
  $region12: #{image_captioning_forward.1} parent=0 // pred_region
    _
  $region13: #{image_captioning_forward.1} parent=0 // pred_fallthru
    _
  // Predicated region
  $region14: #{image_captioning_forward.1} parent=0 // pred_check
    _
  $region15: #{image_captioning_forward.1} parent=0 // pred_check_branch
    %23 = sbr.rel (0) target = $region17
  $region16: #{image_captioning_forward.1} parent=0 // pred_region
    _
  $region17: #{image_captioning_forward.1} parent=0 // pred_fallthru
    _
  // Predicated region
  $region18: #{image_captioning_forward.1} parent=0 // pred_check
    _
  $region19: #{image_captioning_forward.1} parent=0 // pred_check_branch
    %25 = sbr.rel (0) target = $region21
  $region20: #{image_captioning_forward.1} parent=0 // pred_region
    _
  $region21: #{image_captioning_forward.1} parent=0 // pred_fallthru
    _
  // Predicated region
  $region22: #{image_captioning_forward.1} parent=0 // pred_check
    _
  $region23: #{image_captioning_forward.1} parent=0 // pred_check_branch
    %27 = sbr.rel (0) target = $region25
  $region24: #{image_captioning_forward.1} parent=0 // pred_region
    _
  $region25: #{image_captioning_forward.1} parent=0 // pred_fallthru
    _
  // Predicated region
  $region26: #{image_captioning_forward.1} parent=0 // pred_check
    _
  $region27: #{image_captioning_forward.1} parent=0 // pred_check_branch
    %29 = sbr.rel (0) target = $region29
  $region28: #{image_captioning_forward.1} parent=0 // pred_region
    _
  $region29: #{image_captioning_forward.1} parent=0 // pred_fallthru
    _
  // Predicated region
  $region30: #{image_captioning_forward.1} parent=0 // pred_check
    _
  $region31: #{image_captioning_forward.1} parent=0 // pred_check_branch
    %31 = sbr.rel (0) target = $region33
  $region32: #{image_captioning_forward.1} parent=0 // pred_region
    _
  $region33: #{image_captioning_forward.1} parent=0 // pred_fallthru
    _
  // Predicated region
  $region34: #{image_captioning_forward.1} parent=0 // pred_check
    _
  $region35: #{image_captioning_forward.1} parent=0 // pred_check_branch
    %33 = sbr.rel (0) target = $region37
  $region36: #{image_captioning_forward.1} parent=0 // pred_region
    _
  $region37: #{image_captioning_forward.1} parent=0 // pred_fallthru
    _
  // Predicated region
  $region38: #{image_captioning_forward.1} parent=0 // pred_check
    _
  $region39: #{image_captioning_forward.1} parent=0 // pred_check_branch
    %35 = sbr.rel (0) target = $region41
  $region40: #{image_captioning_forward.1} parent=0 // pred_region
    _
  $region41: #{image_captioning_forward.1} parent=0 // pred_fallthru
    _
  // Predicated region
  $region42: #{image_captioning_forward.1} parent=0 // pred_check
    _
  $region43: #{image_captioning_forward.1} parent=0 // pred_check_branch
    %37 = sbr.rel (0) target = $region45
  $region44: #{image_captioning_forward.1} parent=0 // pred_region
    _
  $region45: #{image_captioning_forward.1} parent=0 // pred_fallthru
    _
  %v39 = vld [vmem:[%s0] sm:$0xf]
  %v40 = vld [vmem:[%s0 + $0x4] sm:$0xf]
  %v41 = vld [vmem:[%s0 + $0x8] sm:$0xf]
  %v42 = vld [vmem:[%s0 + $0xc] sm:$0xf]
  %v43 = vld [vmem:[%s0 + $0x10] sm:$0xf]
  %v44 = vld [vmem:[%s0 + $0x14] sm:$0xf]
  %v45 = vld [vmem:[%s0 + $0x18] sm:$0xf]
  %v46 = vld [vmem:[%s0 + $0x1c] sm:$0xf]
  %v47 = vld [vmem:[%s0 + $0x20] sm:$0xf]
  %v48 = vld [vmem:[%s0 + $0x24] sm:$0xf]
  %v49 = vld [vmem:[%s0 + $0x28] sm:$0xf]
  %v50 = vld [vmem:[%s0 + $0x2c] sm:$0xf]
  %v51 = vld [vmem:[%s0 + $0x30] sm:$0xf]
  %v52 = vld [vmem:[%s0 + $0x34] sm:$0xf]
  %v53 = vld [vmem:[%s0 + $0x38] sm:$0xf]
  %v54 = vld [vmem:[%s0 + $0x3c] sm:$0xf]
  %v55 = vld [vmem:[%s0 + $0x40] sm:$0xf]
  %v56 = vld [vmem:[%s0 + $0x44] sm:$0xf]
  %v57 = vld [vmem:[%s0 + $0x48] sm:$0xf]
  %v58 = vld [vmem:[%s0 + $0x4c] sm:$0xf]
  %v59 = vld [vmem:[%s0 + $0x50] sm:$0xf]
  %v60 = vld [vmem:[%s0 + $0x54] sm:$0xf]
  %v61 = vld [vmem:[%s0 + $0x58] sm:$0xf]
  %v62 = vld [vmem:[%s0 + $0x5c] sm:$0xf]
  %v63 = vld [vmem:[%s0 + $0x60] sm:$0xf]
  %v64 = vld [vmem:[%s0 + $0x64] sm:$0xf]
  %v65 = vld [vmem:[%s0 + $0x68] sm:$0xf]
  %v66 = vld [vmem:[%s0 + $0x6c] sm:$0xf]
  %v67 = vld [vmem:[%s0 + $0x70] sm:$0xf]
  %v68 = vld [vmem:[%s0 + $0x74] sm:$0xf]
  %v69 = vld [vmem:[%s0 + $0x78] sm:$0xf]
  %v70 = vld [vmem:[%s0 + $0x7c] sm:$0xf]
  %v71 = vld [vmem:[%s0 + $0x80] sm:$0xf]
  %v72 = vld [vmem:[%s0 + $0x84] sm:$0xf]
  %v73 = vld [vmem:[%s0 + $0x88] sm:$0xf]
  %v74 = vld [vmem:[%s0 + $0x8c] sm:$0xf]
  %v75 = vld [vmem:[%s0 + $0x90] sm:$0xf]
  %v76 = vld [vmem:[%s0 + $0x94] sm:$0xf]
  %v77 = vld [vmem:[%s0 + $0x98] sm:$0xf]
  %v78 = vld [vmem:[%s0 + $0x9c] sm:$0xf]
  %v79 = vld [vmem:[%s0 + $0xa0] sm:$0xf]
  %v80 = vld [vmem:[%s0 + $0xa4] sm:$0xf]
  %v81 = vld [vmem:[%s0 + $0xa8] sm:$0xf]
  %v82 = vld [vmem:[%s0 + $0xac] sm:$0xf]
  %v83 = vld [vmem:[%s0 + $0xb0] sm:$0xf]
  %v84 = vld [vmem:[%s0 + $0xb4] sm:$0xf]
  %v85 = vld [vmem:[%s0 + $0xb8] sm:$0xf]
  %v86 = vld [vmem:[%s0 + $0xbc] sm:$0xf]
  %v87 = vld [vmem:[%s0 + $0xc0] sm:$0xf]
  %v88 = vld [vmem:[%s0 + $0xc4] sm:$0xf]
  %v89 = vld [vmem:[%s0 + $0xc8] sm:$0xf]
  %v90 = vld [vmem:[%s0 + $0xcc] sm:$0xf]
  %v91 = vld [vmem:[%s0 + $0xd0] sm:$0xf]
  %v92 = vld [vmem:[%s0 + $0xd4] sm:$0xf]
  %v93 = vld [vmem:[%s0 + $0xd8] sm:$0xf]
  %v94 = vld [vmem:[%s0 + $0xdc] sm:$0xf]
  %v95 = vld [vmem:[%s0 + $0xe0] sm:$0xf]
  %v96 = vld [vmem:[%s0 + $0xe4] sm:$0xf]
  %v97 = vld [vmem:[%s0 + $0xe8] sm:$0xf]
  %v98 = vld [vmem:[%s0 + $0xec] sm:$0xf]
  %v99 = vld [vmem:[%s0 + $0xf0] sm:$0xf]
  %v100 = vld [vmem:[%s0 + $0xf4] sm:$0xf]
  %v101 = vld [vmem:[%s0 + $0xf8] sm:$0xf]
  %v102 = vld [vmem:[%s0 + $0xfc] sm:$0xf]
  %v103 = vld [vmem:[%s1] sm:$0xf]
  %v104 = vld [vmem:[%s1 + $0x4] sm:$0xf]
  %v105 = vld [vmem:[%s1 + $0x8] sm:$0xf]
  %v106 = vld [vmem:[%s1 + $0xc] sm:$0xf]
  %v107 = vld [vmem:[%s2] sm:$0x1]
  %v109 = vlaneseq
  %v110 = vshrl.u32 %v109, 7
  %v111 = vsub.s32 0, %v110
  %v112 = vrot.slane %v107, %v111
  %v178 = vunpack.c.l.b16 %v39
  %v179 = vunpack.c.l.b16 %v40
  %v180 = vunpack.c.l.b16 %v41
  %v181 = vunpack.c.l.b16 %v42
  %v182 = vunpack.c.l.b16 %v43
  %v183 = vunpack.c.l.b16 %v44
  %v184 = vunpack.c.l.b16 %v45
  %v185 = vunpack.c.l.b16 %v46
  %v186 = vunpack.c.l.b16 %v47
  %v187 = vunpack.c.l.b16 %v48
  %v188 = vunpack.c.l.b16 %v49
  %v189 = vunpack.c.l.b16 %v50
  %v190 = vunpack.c.l.b16 %v51
  %v191 = vunpack.c.l.b16 %v52
  %v192 = vunpack.c.l.b16 %v53
  %v193 = vunpack.c.l.b16 %v54
  %v194 = vunpack.c.l.b16 %v55
  %v195 = vunpack.c.l.b16 %v56
  %v196 = vunpack.c.l.b16 %v57
  %v197 = vunpack.c.l.b16 %v58
  %v198 = vunpack.c.l.b16 %v59
  %v199 = vunpack.c.l.b16 %v60
  %v200 = vunpack.c.l.b16 %v61
  %v201 = vunpack.c.l.b16 %v62
  %v202 = vunpack.c.l.b16 %v63
  %v203 = vunpack.c.l.b16 %v64
  %v204 = vunpack.c.l.b16 %v65
  %v205 = vunpack.c.l.b16 %v66
  %v206 = vunpack.c.l.b16 %v67
  %v207 = vunpack.c.l.b16 %v68
  %v208 = vunpack.c.l.b16 %v69
  %v209 = vunpack.c.l.b16 %v70
  %v210 = vunpack.c.l.b16 %v71
  %v211 = vunpack.c.l.b16 %v72
  %v212 = vunpack.c.l.b16 %v73
  %v213 = vunpack.c.l.b16 %v74
  %v214 = vunpack.c.l.b16 %v75
  %v215 = vunpack.c.l.b16 %v76
  %v216 = vunpack.c.l.b16 %v77
  %v217 = vunpack.c.l.b16 %v78
  %v218 = vunpack.c.l.b16 %v79
  %v219 = vunpack.c.l.b16 %v80
  %v220 = vunpack.c.l.b16 %v81
  %v221 = vunpack.c.l.b16 %v82
  %v222 = vunpack.c.l.b16 %v83
  %v223 = vunpack.c.l.b16 %v84
  %v224 = vunpack.c.l.b16 %v85
  %v225 = vunpack.c.l.b16 %v86
  %v226 = vunpack.c.l.b16 %v87
  %v227 = vunpack.c.l.b16 %v88
  %v228 = vunpack.c.l.b16 %v89
  %v229 = vunpack.c.l.b16 %v90
  %v230 = vunpack.c.l.b16 %v91
  %v231 = vunpack.c.l.b16 %v92
  %v232 = vunpack.c.l.b16 %v93
  %v233 = vunpack.c.l.b16 %v94
  %v234 = vunpack.c.l.b16 %v95
  %v235 = vunpack.c.l.b16 %v96
  %v236 = vunpack.c.l.b16 %v97
  %v237 = vunpack.c.l.b16 %v98
  %v238 = vunpack.c.l.b16 %v99
  %v239 = vunpack.c.l.b16 %v100
  %v240 = vunpack.c.l.b16 %v101
  %v241 = vunpack.c.l.b16 %v102
  %v242 = vpack.c.b16 %v179, %v178
  %v243 = vpack.c.b16 %v181, %v180
  %v244 = vpack.c.b16 %v183, %v182
  %v245 = vpack.c.b16 %v185, %v184
  %v246 = vpack.c.b16 %v187, %v186
  %v247 = vpack.c.b16 %v189, %v188
  %v248 = vpack.c.b16 %v191, %v190
  %v249 = vpack.c.b16 %v193, %v192
  %v250 = vpack.c.b16 %v195, %v194
  %v251 = vpack.c.b16 %v197, %v196
  %v252 = vpack.c.b16 %v199, %v198
  %v253 = vpack.c.b16 %v201, %v200
  %v254 = vpack.c.b16 %v203, %v202
  %v255 = vpack.c.b16 %v205, %v204
  %v256 = vpack.c.b16 %v207, %v206
  %v257 = vpack.c.b16 %v209, %v208
  %v258 = vpack.c.b16 %v211, %v210
  %v259 = vpack.c.b16 %v213, %v212
  %v260 = vpack.c.b16 %v215, %v214
  %v261 = vpack.c.b16 %v217, %v216
  %v262 = vpack.c.b16 %v219, %v218
  %v263 = vpack.c.b16 %v221, %v220
  %v264 = vpack.c.b16 %v223, %v222
  %v265 = vpack.c.b16 %v225, %v224
  %v266 = vpack.c.b16 %v227, %v226
  %v267 = vpack.c.b16 %v229, %v228
  %v268 = vpack.c.b16 %v231, %v230
  %v269 = vpack.c.b16 %v233, %v232
  %v270 = vpack.c.b16 %v235, %v234
  %v271 = vpack.c.b16 %v237, %v236
  %v272 = vpack.c.b16 %v239, %v238
  %v273 = vpack.c.b16 %v241, %v240
  %v278 = vunpack.c.l.b16 %v103
  %v279 = vunpack.c.l.b16 %v104
  %v280 = vunpack.c.l.b16 %v105
  %v281 = vunpack.c.l.b16 %v106
  %v282 = vpack.c.b16 %v279, %v278
  %v283 = vpack.c.b16 %v281, %v280
  %vm286 = vcmask 261120
  %v288 = vsel %vm286, %v242, 0
  %v291 = vsel %vm286, %v243, 0
  %v294 = vsel %vm286, %v244, 0
  %v297 = vsel %vm286, %v245, 0
  %v300 = vsel %vm286, %v246, 0
  %v303 = vsel %vm286, %v247, 0
  %v306 = vsel %vm286, %v248, 0
  %v309 = vsel %vm286, %v249, 0
  %v312 = vsel %vm286, %v250, 0
  %v315 = vsel %vm286, %v251, 0
  %v318 = vsel %vm286, %v252, 0
  %v321 = vsel %vm286, %v253, 0
  %v324 = vsel %vm286, %v254, 0
  %v327 = vsel %vm286, %v255, 0
  %v330 = vsel %vm286, %v256, 0
  %v333 = vsel %vm286, %v257, 0
  %v336 = vsel %vm286, %v258, 0
  %v339 = vsel %vm286, %v259, 0
  %v342 = vsel %vm286, %v260, 0
  %v345 = vsel %vm286, %v261, 0
  %v348 = vsel %vm286, %v262, 0
  %v351 = vsel %vm286, %v263, 0
  %v354 = vsel %vm286, %v264, 0
  %v357 = vsel %vm286, %v265, 0
  %v360 = vsel %vm286, %v266, 0
  %v363 = vsel %vm286, %v267, 0
  %v366 = vsel %vm286, %v268, 0
  %v369 = vsel %vm286, %v269, 0
  %v372 = vsel %vm286, %v270, 0
  %v375 = vsel %vm286, %v271, 0
  %v378 = vsel %vm286, %v272, 0
  %v381 = vsel %vm286, %v273, 0
  %383 = vmatprep.subr.bf16.mxu0 0
  %384 = vmatpush1.bf16.msra.mxu0 0
  %385 = vmatprep.subr.bf16.mxu0 0
  %386 = vmatpush1.bf16.msra.mxu0 0
  %387 = vmatprep.subr.bf16.mxu0 0
  %388 = vmatpush1.bf16.msra.mxu0 0
  %389 = vmatprep.subr.bf16.mxu0 0
  %390 = vmatpush1.bf16.msra.mxu0 0
  %391 = vmatprep.subr.bf16.mxu0 0
  %392 = vmatpush1.bf16.msra.mxu0 0
  %393 = vmatprep.subr.bf16.mxu0 0
  %394 = vmatpush1.bf16.msra.mxu0 0
  %395 = vmatprep.subr.bf16.mxu0 0
  %396 = vmatpush1.bf16.msra.mxu0 %v283
  %397 = vmatprep.subr.bf16.mxu0 0
  %398 = vmatpush1.bf16.msra.mxu0 %v282
  %399 = vmatprep.subr.bf16.mxu0 0
  %400 = vmatpush2.bf16.msra.mxu0 0
  %401 = vmatprep.subr.bf16.mxu0 0
  %402 = vmatpush2.bf16.msra.mxu0 0
  %403 = vmatprep.subr.bf16.mxu0 0
  %404 = vmatpush2.bf16.msra.mxu0 0
  %405 = vmatprep.subr.bf16.mxu0 0
  %406 = vmatpush2.bf16.msra.mxu0 0
  %407 = vmatprep.subr.bf16.mxu0 0
  %408 = vmatpush2.bf16.msra.mxu0 0
  %409 = vmatprep.subr.bf16.mxu0 0
  %410 = vmatpush2.bf16.msra.mxu0 0
  %411 = vmatprep.subr.bf16.mxu0 0
  %412 = vmatpush2.bf16.msra.mxu0 0
  %413 = vmatprep.subr.bf16.mxu0 0
  %414 = vmatpush2.bf16.msra.mxu0 0
  %415 = vmatprep.mubr.bf16.mxu0 0
  %416 = vmatmul.mubr.bf16.gmra.mxu0 %v288
  %v417 = vpop.f32.mrf.mxu0
  %v418 = vadd.f32 %v112, %v417
  %v419 = vpop.f32.mrf.mxu0
  %v420 = vpop.f32.mrf.mxu0
  %v421 = vadd.f32 %v112, %v420
  %v422 = vpop.f32.mrf.mxu0
  %423 = vmatprep.mubr.bf16.mxu0 0
  %424 = vmatmul.mubr.bf16.gmra.mxu0 %v291
  %v425 = vpop.f32.mrf.mxu0
  %v426 = vadd.f32 %v112, %v425
  %v427 = vpop.f32.mrf.mxu0
  %v428 = vpop.f32.mrf.mxu0
  %v429 = vadd.f32 %v112, %v428
  %v430 = vpop.f32.mrf.mxu0
  %431 = vmatprep.mubr.bf16.mxu0 0
  %432 = vmatmul.mubr.bf16.gmra.mxu0 %v294
  %v433 = vpop.f32.mrf.mxu0
  %v434 = vadd.f32 %v112, %v433
  %v435 = vpop.f32.mrf.mxu0
  %v436 = vpop.f32.mrf.mxu0
  %v437 = vadd.f32 %v112, %v436
  %v438 = vpop.f32.mrf.mxu0
  %439 = vmatprep.mubr.bf16.mxu0 0
  %440 = vmatmul.mubr.bf16.gmra.mxu0 %v297
  %v441 = vpop.f32.mrf.mxu0
  %v442 = vadd.f32 %v112, %v441
  %v443 = vpop.f32.mrf.mxu0
  %v444 = vpop.f32.mrf.mxu0
  %v445 = vadd.f32 %v112, %v444
  %v446 = vpop.f32.mrf.mxu0
  %447 = vmatprep.mubr.bf16.mxu0 0
  %448 = vmatmul.mubr.bf16.gmra.mxu0 %v300
  %v449 = vpop.f32.mrf.mxu0
  %v450 = vadd.f32 %v112, %v449
  %v451 = vpop.f32.mrf.mxu0
  %v452 = vpop.f32.mrf.mxu0
  %v453 = vadd.f32 %v112, %v452
  %v454 = vpop.f32.mrf.mxu0
  %455 = vmatprep.mubr.bf16.mxu0 0
  %456 = vmatmul.mubr.bf16.gmra.mxu0 %v303
  %v457 = vpop.f32.mrf.mxu0
  %v458 = vadd.f32 %v112, %v457
  %v459 = vpop.f32.mrf.mxu0
  %v460 = vpop.f32.mrf.mxu0
  %v461 = vadd.f32 %v112, %v460
  %v462 = vpop.f32.mrf.mxu0
  %463 = vmatprep.mubr.bf16.mxu0 0
  %464 = vmatmul.mubr.bf16.gmra.mxu0 %v306
  %v465 = vpop.f32.mrf.mxu0
  %v466 = vadd.f32 %v112, %v465
  %v467 = vpop.f32.mrf.mxu0
  %v468 = vpop.f32.mrf.mxu0
  %v469 = vadd.f32 %v112, %v468
  %v470 = vpop.f32.mrf.mxu0
  %471 = vmatprep.mubr.bf16.mxu0 0
  %472 = vmatmul.mubr.bf16.gmra.mxu0 %v309
  %v473 = vpop.f32.mrf.mxu0
  %v474 = vadd.f32 %v112, %v473
  %v475 = vpop.f32.mrf.mxu0
  %v476 = vpop.f32.mrf.mxu0
  %v477 = vadd.f32 %v112, %v476
  %v478 = vpop.f32.mrf.mxu0
  %479 = vmatprep.mubr.bf16.mxu0 0
  %480 = vmatmul.mubr.bf16.gmra.mxu0 %v312
  %v481 = vpop.f32.mrf.mxu0
  %v482 = vadd.f32 %v112, %v481
  %v483 = vpop.f32.mrf.mxu0
  %v484 = vpop.f32.mrf.mxu0
  %v485 = vadd.f32 %v112, %v484
  %v486 = vpop.f32.mrf.mxu0
  %487 = vmatprep.mubr.bf16.mxu0 0
  %488 = vmatmul.mubr.bf16.gmra.mxu0 %v315
  %v489 = vpop.f32.mrf.mxu0
  %v490 = vadd.f32 %v112, %v489
  %v491 = vpop.f32.mrf.mxu0
  %v492 = vpop.f32.mrf.mxu0
  %v493 = vadd.f32 %v112, %v492
  %v494 = vpop.f32.mrf.mxu0
  %495 = vmatprep.mubr.bf16.mxu0 0
  %496 = vmatmul.mubr.bf16.gmra.mxu0 %v318
  %v497 = vpop.f32.mrf.mxu0
  %v498 = vadd.f32 %v112, %v497
  %v499 = vpop.f32.mrf.mxu0
  %v500 = vpop.f32.mrf.mxu0
  %v501 = vadd.f32 %v112, %v500
  %v502 = vpop.f32.mrf.mxu0
  %503 = vmatprep.mubr.bf16.mxu0 0
  %504 = vmatmul.mubr.bf16.gmra.mxu0 %v321
  %v505 = vpop.f32.mrf.mxu0
  %v506 = vadd.f32 %v112, %v505
  %v507 = vpop.f32.mrf.mxu0
  %v508 = vpop.f32.mrf.mxu0
  %v509 = vadd.f32 %v112, %v508
  %v510 = vpop.f32.mrf.mxu0
  %511 = vmatprep.mubr.bf16.mxu0 0
  %512 = vmatmul.mubr.bf16.gmra.mxu0 %v324
  %v513 = vpop.f32.mrf.mxu0
  %v514 = vadd.f32 %v112, %v513
  %v515 = vpop.f32.mrf.mxu0
  %v516 = vpop.f32.mrf.mxu0
  %v517 = vadd.f32 %v112, %v516
  %v518 = vpop.f32.mrf.mxu0
  %519 = vmatprep.mubr.bf16.mxu0 0
  %520 = vmatmul.mubr.bf16.gmra.mxu0 %v327
  %v521 = vpop.f32.mrf.mxu0
  %v522 = vadd.f32 %v112, %v521
  %v523 = vpop.f32.mrf.mxu0
  %v524 = vpop.f32.mrf.mxu0
  %v525 = vadd.f32 %v112, %v524
  %v526 = vpop.f32.mrf.mxu0
  %527 = vmatprep.mubr.bf16.mxu0 0
  %528 = vmatmul.mubr.bf16.gmra.mxu0 %v330
  %v529 = vpop.f32.mrf.mxu0
  %v530 = vadd.f32 %v112, %v529
  %v531 = vpop.f32.mrf.mxu0
  %v532 = vpop.f32.mrf.mxu0
  %v533 = vadd.f32 %v112, %v532
  %v534 = vpop.f32.mrf.mxu0
  %535 = vmatprep.mubr.bf16.mxu0 0
  %536 = vmatmul.mubr.bf16.gmra.mxu0 %v333
  %v537 = vpop.f32.mrf.mxu0
  %v538 = vadd.f32 %v112, %v537
  %v539 = vpop.f32.mrf.mxu0
  %v540 = vpop.f32.mrf.mxu0
  %v541 = vadd.f32 %v112, %v540
  %v542 = vpop.f32.mrf.mxu0
  %543 = vmatprep.mubr.bf16.mxu0 0
  %544 = vmatmul.mubr.bf16.gmra.mxu0 %v336
  %v545 = vpop.f32.mrf.mxu0
  %v546 = vadd.f32 %v112, %v545
  %v547 = vpop.f32.mrf.mxu0
  %v548 = vpop.f32.mrf.mxu0
  %v549 = vadd.f32 %v112, %v548
  %v550 = vpop.f32.mrf.mxu0
  %551 = vmatprep.mubr.bf16.mxu0 0
  %552 = vmatmul.mubr.bf16.gmra.mxu0 %v339
  %v553 = vpop.f32.mrf.mxu0
  %v554 = vadd.f32 %v112, %v553
  %v555 = vpop.f32.mrf.mxu0
  %v556 = vpop.f32.mrf.mxu0
  %v557 = vadd.f32 %v112, %v556
  %v558 = vpop.f32.mrf.mxu0
  %559 = vmatprep.mubr.bf16.mxu0 0
  %560 = vmatmul.mubr.bf16.gmra.mxu0 %v342
  %v561 = vpop.f32.mrf.mxu0
  %v562 = vadd.f32 %v112, %v561
  %v563 = vpop.f32.mrf.mxu0
  %v564 = vpop.f32.mrf.mxu0
  %v565 = vadd.f32 %v112, %v564
  %v566 = vpop.f32.mrf.mxu0
  %567 = vmatprep.mubr.bf16.mxu0 0
  %568 = vmatmul.mubr.bf16.gmra.mxu0 %v345
  %v569 = vpop.f32.mrf.mxu0
  %v570 = vadd.f32 %v112, %v569
  %v571 = vpop.f32.mrf.mxu0
  %v572 = vpop.f32.mrf.mxu0
  %v573 = vadd.f32 %v112, %v572
  %v574 = vpop.f32.mrf.mxu0
  %575 = vmatprep.mubr.bf16.mxu0 0
  %576 = vmatmul.mubr.bf16.gmra.mxu0 %v348
  %v577 = vpop.f32.mrf.mxu0
  %v578 = vadd.f32 %v112, %v577
  %v579 = vpop.f32.mrf.mxu0
  %v580 = vpop.f32.mrf.mxu0
  %v581 = vadd.f32 %v112, %v580
  %v582 = vpop.f32.mrf.mxu0
  %583 = vmatprep.mubr.bf16.mxu0 0
  %584 = vmatmul.mubr.bf16.gmra.mxu0 %v351
  %v585 = vpop.f32.mrf.mxu0
  %v586 = vadd.f32 %v112, %v585
  %v587 = vpop.f32.mrf.mxu0
  %v588 = vpop.f32.mrf.mxu0
  %v589 = vadd.f32 %v112, %v588
  %v590 = vpop.f32.mrf.mxu0
  %591 = vmatprep.mubr.bf16.mxu0 0
  %592 = vmatmul.mubr.bf16.gmra.mxu0 %v354
  %v593 = vpop.f32.mrf.mxu0
  %v594 = vadd.f32 %v112, %v593
  %v595 = vpop.f32.mrf.mxu0
  %v596 = vpop.f32.mrf.mxu0
  %v597 = vadd.f32 %v112, %v596
  %v598 = vpop.f32.mrf.mxu0
  %599 = vmatprep.mubr.bf16.mxu0 0
  %600 = vmatmul.mubr.bf16.gmra.mxu0 %v357
  %v601 = vpop.f32.mrf.mxu0
  %v602 = vadd.f32 %v112, %v601
  %v603 = vpop.f32.mrf.mxu0
  %v604 = vpop.f32.mrf.mxu0
  %v605 = vadd.f32 %v112, %v604
  %v606 = vpop.f32.mrf.mxu0
  %607 = vmatprep.mubr.bf16.mxu0 0
  %608 = vmatmul.mubr.bf16.gmra.mxu0 %v360
  %v609 = vpop.f32.mrf.mxu0
  %v610 = vadd.f32 %v112, %v609
  %v611 = vpop.f32.mrf.mxu0
  %v612 = vpop.f32.mrf.mxu0
  %v613 = vadd.f32 %v112, %v612
  %v614 = vpop.f32.mrf.mxu0
  %615 = vmatprep.mubr.bf16.mxu0 0
  %616 = vmatmul.mubr.bf16.gmra.mxu0 %v363
  %v617 = vpop.f32.mrf.mxu0
  %v618 = vadd.f32 %v112, %v617
  %v619 = vpop.f32.mrf.mxu0
  %v620 = vpop.f32.mrf.mxu0
  %v621 = vadd.f32 %v112, %v620
  %v622 = vpop.f32.mrf.mxu0
  %623 = vmatprep.mubr.bf16.mxu0 0
  %624 = vmatmul.mubr.bf16.gmra.mxu0 %v366
  %v625 = vpop.f32.mrf.mxu0
  %v626 = vadd.f32 %v112, %v625
  %v627 = vpop.f32.mrf.mxu0
  %v628 = vpop.f32.mrf.mxu0
  %v629 = vadd.f32 %v112, %v628
  %v630 = vpop.f32.mrf.mxu0
  %631 = vmatprep.mubr.bf16.mxu0 0
  %632 = vmatmul.mubr.bf16.gmra.mxu0 %v369
  %v633 = vpop.f32.mrf.mxu0
  %v634 = vadd.f32 %v112, %v633
  %v635 = vpop.f32.mrf.mxu0
  %v636 = vpop.f32.mrf.mxu0
  %v637 = vadd.f32 %v112, %v636
  %v638 = vpop.f32.mrf.mxu0
  %639 = vmatprep.mubr.bf16.mxu0 0
  %640 = vmatmul.mubr.bf16.gmra.mxu0 %v372
  %v641 = vpop.f32.mrf.mxu0
  %v642 = vadd.f32 %v112, %v641
  %v643 = vpop.f32.mrf.mxu0
  %v644 = vpop.f32.mrf.mxu0
  %v645 = vadd.f32 %v112, %v644
  %v646 = vpop.f32.mrf.mxu0
  %647 = vmatprep.mubr.bf16.mxu0 0
  %648 = vmatmul.mubr.bf16.gmra.mxu0 %v375
  %v649 = vpop.f32.mrf.mxu0
  %v650 = vadd.f32 %v112, %v649
  %v651 = vpop.f32.mrf.mxu0
  %v652 = vpop.f32.mrf.mxu0
  %v653 = vadd.f32 %v112, %v652
  %v654 = vpop.f32.mrf.mxu0
  %655 = vmatprep.mubr.bf16.mxu0 0
  %656 = vmatmul.mubr.bf16.gmra.mxu0 %v378
  %v657 = vpop.f32.mrf.mxu0
  %v658 = vadd.f32 %v112, %v657
  %v659 = vpop.f32.mrf.mxu0
  %v660 = vpop.f32.mrf.mxu0
  %v661 = vadd.f32 %v112, %v660
  %v662 = vpop.f32.mrf.mxu0
  %663 = vmatprep.mubr.bf16.mxu0 0
  %664 = vmatmul.mubr.bf16.gmra.mxu0 %v381
  %v665 = vpop.f32.mrf.mxu0
  %v666 = vadd.f32 %v112, %v665
  %v667 = vpop.f32.mrf.mxu0
  %v668 = vpop.f32.mrf.mxu0
  %v669 = vadd.f32 %v112, %v668
  %v670 = vpop.f32.mrf.mxu0
  %671 = vdwg.mxu0
  %v672 = vmax.f32 %v418, 0.0
  %v673 = vmax.f32 %v421, 0.0
  %v674 = vmax.f32 %v426, 0.0
  %v675 = vmax.f32 %v429, 0.0
  %v676 = vmax.f32 %v434, 0.0
  %v677 = vmax.f32 %v437, 0.0
  %v678 = vmax.f32 %v442, 0.0
  %v679 = vmax.f32 %v445, 0.0
  %v680 = vmax.f32 %v450, 0.0
  %v681 = vmax.f32 %v453, 0.0
  %v682 = vmax.f32 %v458, 0.0
  %v683 = vmax.f32 %v461, 0.0
  %v684 = vmax.f32 %v466, 0.0
  %v685 = vmax.f32 %v469, 0.0
  %v686 = vmax.f32 %v474, 0.0
  %v687 = vmax.f32 %v477, 0.0
  %v688 = vmax.f32 %v482, 0.0
  %v689 = vmax.f32 %v485, 0.0
  %v690 = vmax.f32 %v490, 0.0
  %v691 = vmax.f32 %v493, 0.0
  %v692 = vmax.f32 %v498, 0.0
  %v693 = vmax.f32 %v501, 0.0
  %v694 = vmax.f32 %v506, 0.0
  %v695 = vmax.f32 %v509, 0.0
  %v696 = vmax.f32 %v514, 0.0
  %v697 = vmax.f32 %v517, 0.0
  %v698 = vmax.f32 %v522, 0.0
  %v699 = vmax.f32 %v525, 0.0
  %v700 = vmax.f32 %v530, 0.0
  %v701 = vmax.f32 %v533, 0.0
  %v702 = vmax.f32 %v538, 0.0
  %v703 = vmax.f32 %v541, 0.0
  %v704 = vmax.f32 %v546, 0.0
  %v705 = vmax.f32 %v549, 0.0
  %v706 = vmax.f32 %v554, 0.0
  %v707 = vmax.f32 %v557, 0.0
  %v708 = vmax.f32 %v562, 0.0
  %v709 = vmax.f32 %v565, 0.0
  %v710 = vmax.f32 %v570, 0.0
  %v711 = vmax.f32 %v573, 0.0
  %v712 = vmax.f32 %v578, 0.0
  %v713 = vmax.f32 %v581, 0.0
  %v714 = vmax.f32 %v586, 0.0
  %v715 = vmax.f32 %v589, 0.0
  %v716 = vmax.f32 %v594, 0.0
  %v717 = vmax.f32 %v597, 0.0
  %v718 = vmax.f32 %v602, 0.0
  %v719 = vmax.f32 %v605, 0.0
  %v720 = vmax.f32 %v610, 0.0
  %v721 = vmax.f32 %v613, 0.0
  %v722 = vmax.f32 %v618, 0.0
  %v723 = vmax.f32 %v621, 0.0
  %v724 = vmax.f32 %v626, 0.0
  %v725 = vmax.f32 %v629, 0.0
  %v726 = vmax.f32 %v634, 0.0
  %v727 = vmax.f32 %v637, 0.0
  %v728 = vmax.f32 %v642, 0.0
  %v729 = vmax.f32 %v645, 0.0
  %v730 = vmax.f32 %v650, 0.0
  %v731 = vmax.f32 %v653, 0.0
  %v732 = vmax.f32 %v658, 0.0
  %v733 = vmax.f32 %v661, 0.0
  %v734 = vmax.f32 %v666, 0.0
  %v735 = vmax.f32 %v669, 0.0
  %v736 = vld [vmem:[%s3] sm:$0xff]
  %v738 = vcombine.high %v736, %v736
  %v740 = vunpack.c.l.s4 1983009808
  %v741 = vunpack.c.0.s8 %v740
  %v742 = vlaneseq
  %v743 = vshrl.u32 %v742, 7
  %v744 = vsub.s32 %v741, %v743
  %v745 = vrot.slane %v736, %v744
  %v747 = vunpack.c.l.s4 1983009808
  %v748 = vunpack.c.0.s8 %v747
  %v749 = vlaneseq
  %v750 = vshrl.u32 %v749, 7
  %v751 = vsub.s32 %v748, %v750
  %v752 = vrot.slane %v738, %v751
  %v753 = vcombine.high %v745, %v745
  %v754 = vcombine.high %v752, %v752
  %759 = vmatprep.subr.mxu0 0.0
  %760 = vmatpush1.msra.mxu0 %v687
  %761 = vmatprep.subr.mxu0 0.0
  %762 = vmatpush1.msra.mxu0 %v686
  %763 = vmatprep.subr.mxu0 0.0
  %764 = vmatpush1.msra.mxu0 %v685
  %765 = vmatprep.subr.mxu0 0.0
  %766 = vmatpush1.msra.mxu0 %v684
  %767 = vmatprep.subr.mxu0 0.0
  %768 = vmatpush1.msra.mxu0 %v683
  %769 = vmatprep.subr.mxu0 0.0
  %770 = vmatpush1.msra.mxu0 %v682
  %771 = vmatprep.subr.mxu0 0.0
  %772 = vmatpush1.msra.mxu0 %v681
  %773 = vmatprep.subr.mxu0 0.0
  %774 = vmatpush1.msra.mxu0 %v680
  %775 = vmatprep.subr.mxu0 0.0
  %776 = vmatpush1.msra.mxu0 %v679
  %777 = vmatprep.subr.mxu0 0.0
  %778 = vmatpush1.msra.mxu0 %v678
  %779 = vmatprep.subr.mxu0 0.0
  %780 = vmatpush1.msra.mxu0 %v677
  %781 = vmatprep.subr.mxu0 0.0
  %782 = vmatpush1.msra.mxu0 %v676
  %783 = vmatprep.subr.mxu0 0.0
  %784 = vmatpush1.msra.mxu0 %v675
  %785 = vmatprep.subr.mxu0 0.0
  %786 = vmatpush1.msra.mxu0 %v674
  %787 = vmatprep.subr.mxu0 0.0
  %788 = vmatpush1.msra.mxu0 %v673
  %789 = vmatprep.subr.mxu0 0.0
  %790 = vmatpush1.msra.mxu0 %v672
  %791 = vmatprep.subr.mxu0 0.0
  %792 = vmatpush2.msra.mxu0 %v703
  %793 = vmatprep.subr.mxu0 0.0
  %794 = vmatpush2.msra.mxu0 %v702
  %795 = vmatprep.subr.mxu0 0.0
  %796 = vmatpush2.msra.mxu0 %v701
  %797 = vmatprep.subr.mxu0 0.0
  %798 = vmatpush2.msra.mxu0 %v700
  %799 = vmatprep.subr.mxu0 0.0
  %800 = vmatpush2.msra.mxu0 %v699
  %801 = vmatprep.subr.mxu0 0.0
  %802 = vmatpush2.msra.mxu0 %v698
  %803 = vmatprep.subr.mxu0 0.0
  %804 = vmatpush2.msra.mxu0 %v697
  %805 = vmatprep.subr.mxu0 0.0
  %806 = vmatpush2.msra.mxu0 %v696
  %807 = vmatprep.subr.mxu0 0.0
  %808 = vmatpush2.msra.mxu0 %v695
  %809 = vmatprep.subr.mxu0 0.0
  %810 = vmatpush2.msra.mxu0 %v694
  %811 = vmatprep.subr.mxu0 0.0
  %812 = vmatpush2.msra.mxu0 %v693
  %813 = vmatprep.subr.mxu0 0.0
  %814 = vmatpush2.msra.mxu0 %v692
  %815 = vmatprep.subr.mxu0 0.0
  %816 = vmatpush2.msra.mxu0 %v691
  %817 = vmatprep.subr.mxu0 0.0
  %818 = vmatpush2.msra.mxu0 %v690
  %819 = vmatprep.subr.mxu0 0.0
  %820 = vmatpush2.msra.mxu0 %v689
  %821 = vmatprep.subr.mxu0 0.0
  %822 = vmatpush2.msra.mxu0 %v688
  %823 = vmatprep.mubr.f32.mxu0 %v753
  %824 = vmatmul.mubr.f32.gmra.mxu0 %v745
  %v825 = vpop.f32.mrf.mxu0
  %v826 = vadd.f32 0.0, %v825
  %v827 = vpop.f32.mrf.mxu0
  %828 = vdwg.mxu0
  %829 = vmatprep.subr.mxu0 0.0
  %830 = vmatpush1.msra.mxu0 %v719
  %831 = vmatprep.subr.mxu0 0.0
  %832 = vmatpush1.msra.mxu0 %v718
  %833 = vmatprep.subr.mxu0 0.0
  %834 = vmatpush1.msra.mxu0 %v717
  %835 = vmatprep.subr.mxu0 0.0
  %836 = vmatpush1.msra.mxu0 %v716
  %837 = vmatprep.subr.mxu0 0.0
  %838 = vmatpush1.msra.mxu0 %v715
  %839 = vmatprep.subr.mxu0 0.0
  %840 = vmatpush1.msra.mxu0 %v714
  %841 = vmatprep.subr.mxu0 0.0
  %842 = vmatpush1.msra.mxu0 %v713
  %843 = vmatprep.subr.mxu0 0.0
  %844 = vmatpush1.msra.mxu0 %v712
  %845 = vmatprep.subr.mxu0 0.0
  %846 = vmatpush1.msra.mxu0 %v711
  %847 = vmatprep.subr.mxu0 0.0
  %848 = vmatpush1.msra.mxu0 %v710
  %849 = vmatprep.subr.mxu0 0.0
  %850 = vmatpush1.msra.mxu0 %v709
  %851 = vmatprep.subr.mxu0 0.0
  %852 = vmatpush1.msra.mxu0 %v708
  %853 = vmatprep.subr.mxu0 0.0
  %854 = vmatpush1.msra.mxu0 %v707
  %855 = vmatprep.subr.mxu0 0.0
  %856 = vmatpush1.msra.mxu0 %v706
  %857 = vmatprep.subr.mxu0 0.0
  %858 = vmatpush1.msra.mxu0 %v705
  %859 = vmatprep.subr.mxu0 0.0
  %860 = vmatpush1.msra.mxu0 %v704
  %861 = vmatprep.subr.mxu0 0.0
  %862 = vmatpush2.msra.mxu0 %v735
  %863 = vmatprep.subr.mxu0 0.0
  %864 = vmatpush2.msra.mxu0 %v734
  %865 = vmatprep.subr.mxu0 0.0
  %866 = vmatpush2.msra.mxu0 %v733
  %867 = vmatprep.subr.mxu0 0.0
  %868 = vmatpush2.msra.mxu0 %v732
  %869 = vmatprep.subr.mxu0 0.0
  %870 = vmatpush2.msra.mxu0 %v731
  %871 = vmatprep.subr.mxu0 0.0
  %872 = vmatpush2.msra.mxu0 %v730
  %873 = vmatprep.subr.mxu0 0.0
  %874 = vmatpush2.msra.mxu0 %v729
  %875 = vmatprep.subr.mxu0 0.0
  %876 = vmatpush2.msra.mxu0 %v728
  %877 = vmatprep.subr.mxu0 0.0
  %878 = vmatpush2.msra.mxu0 %v727
  %879 = vmatprep.subr.mxu0 0.0
  %880 = vmatpush2.msra.mxu0 %v726
  %881 = vmatprep.subr.mxu0 0.0
  %882 = vmatpush2.msra.mxu0 %v725
  %883 = vmatprep.subr.mxu0 0.0
  %884 = vmatpush2.msra.mxu0 %v724
  %885 = vmatprep.subr.mxu0 0.0
  %886 = vmatpush2.msra.mxu0 %v723
  %887 = vmatprep.subr.mxu0 0.0
  %888 = vmatpush2.msra.mxu0 %v722
  %889 = vmatprep.subr.mxu0 0.0
  %890 = vmatpush2.msra.mxu0 %v721
  %891 = vmatprep.subr.mxu0 0.0
  %892 = vmatpush2.msra.mxu0 %v720
  %893 = vmatprep.mubr.f32.mxu0 %v754
  %894 = vmatmul.mubr.f32.gmra.mxu0 %v752
  %v895 = vpop.f32.mrf.mxu0
  %v896 = vadd.f32 %v826, %v895
  %v897 = vpop.f32.mrf.mxu0
  %898 = vdwg.mxu0
  %v899 = vld [vmem:[%s4] sm:$0xff]
  %v900 = vld [vmem:[%s4 + $0x8] sm:$0xff]
  %v901 = vld [vmem:[%s4 + $0x10] sm:$0xff]
  %v902 = vld [vmem:[%s4 + $0x18] sm:$0xff]
  %v903 = vld [vmem:[%s4 + $0x20] sm:$0xff]
  %v904 = vld [vmem:[%s4 + $0x28] sm:$0xff]
  %v905 = vld [vmem:[%s4 + $0x30] sm:$0xff]
  %v906 = vld [vmem:[%s4 + $0x38] sm:$0xff]
  %v907 = vld [vmem:[%s4 + $0x40] sm:$0xff]
  %v908 = vld [vmem:[%s4 + $0x48] sm:$0xff]
  %v909 = vld [vmem:[%s4 + $0x50] sm:$0xff]
  %v910 = vld [vmem:[%s4 + $0x58] sm:$0xff]
  %v911 = vld [vmem:[%s4 + $0x60] sm:$0xff]
  %v912 = vld [vmem:[%s4 + $0x68] sm:$0xff]
  %v913 = vld [vmem:[%s4 + $0x70] sm:$0xff]
  %v914 = vld [vmem:[%s4 + $0x78] sm:$0xff]
  %v915 = vld [vmem:[%s5] sm:$0x1]
  %v917 = vlaneseq
  %v918 = vshrl.u32 %v917, 7
  %v919 = vsub.s32 0, %v918
  %v920 = vrot.slane %v915, %v919
  %922 = vmatprep.subr.mxu0 0.0
  %923 = vmatpush1.msra.mxu0 %v914
  %924 = vmatprep.subr.mxu0 0.0
  %925 = vmatpush1.msra.mxu0 %v913
  %926 = vmatprep.subr.mxu0 0.0
  %927 = vmatpush1.msra.mxu0 %v912
  %928 = vmatprep.subr.mxu0 0.0
  %929 = vmatpush1.msra.mxu0 %v911
  %930 = vmatprep.subr.mxu0 0.0
  %931 = vmatpush1.msra.mxu0 %v910
  %932 = vmatprep.subr.mxu0 0.0
  %933 = vmatpush1.msra.mxu0 %v909
  %934 = vmatprep.subr.mxu0 0.0
  %935 = vmatpush1.msra.mxu0 %v908
  %936 = vmatprep.subr.mxu0 0.0
  %937 = vmatpush1.msra.mxu0 %v907
  %938 = vmatprep.subr.mxu0 0.0
  %939 = vmatpush1.msra.mxu0 %v906
  %940 = vmatprep.subr.mxu0 0.0
  %941 = vmatpush1.msra.mxu0 %v905
  %942 = vmatprep.subr.mxu0 0.0
  %943 = vmatpush1.msra.mxu0 %v904
  %944 = vmatprep.subr.mxu0 0.0
  %945 = vmatpush1.msra.mxu0 %v903
  %946 = vmatprep.subr.mxu0 0.0
  %947 = vmatpush1.msra.mxu0 %v902
  %948 = vmatprep.subr.mxu0 0.0
  %949 = vmatpush1.msra.mxu0 %v901
  %950 = vmatprep.subr.mxu0 0.0
  %951 = vmatpush1.msra.mxu0 %v900
  %952 = vmatprep.subr.mxu0 0.0
  %953 = vmatpush1.msra.mxu0 %v899
  %954 = vmatprep.subr.mxu0 0.0
  %955 = vmatpush2.msra.mxu0 0.0
  %956 = vmatprep.subr.mxu0 0.0
  %957 = vmatpush2.msra.mxu0 0.0
  %958 = vmatprep.subr.mxu0 0.0
  %959 = vmatpush2.msra.mxu0 0.0
  %960 = vmatprep.subr.mxu0 0.0
  %961 = vmatpush2.msra.mxu0 0.0
  %962 = vmatprep.subr.mxu0 0.0
  %963 = vmatpush2.msra.mxu0 0.0
  %964 = vmatprep.subr.mxu0 0.0
  %965 = vmatpush2.msra.mxu0 0.0
  %966 = vmatprep.subr.mxu0 0.0
  %967 = vmatpush2.msra.mxu0 0.0
  %968 = vmatprep.subr.mxu0 0.0
  %969 = vmatpush2.msra.mxu0 0.0
  %970 = vmatprep.subr.mxu0 0.0
  %971 = vmatpush2.msra.mxu0 0.0
  %972 = vmatprep.subr.mxu0 0.0
  %973 = vmatpush2.msra.mxu0 0.0
  %974 = vmatprep.subr.mxu0 0.0
  %975 = vmatpush2.msra.mxu0 0.0
  %976 = vmatprep.subr.mxu0 0.0
  %977 = vmatpush2.msra.mxu0 0.0
  %978 = vmatprep.subr.mxu0 0.0
  %979 = vmatpush2.msra.mxu0 0.0
  %980 = vmatprep.subr.mxu0 0.0
  %981 = vmatpush2.msra.mxu0 0.0
  %982 = vmatprep.subr.mxu0 0.0
  %983 = vmatpush2.msra.mxu0 0.0
  %984 = vmatprep.subr.mxu0 0.0
  %985 = vmatpush2.msra.mxu0 0.0
  %986 = vmatprep.mubr.f32.mxu0 0.0
  %987 = vmatmul.mubr.f32.gmra.mxu0 %v896
  %v988 = vpop.f32.mrf.mxu0
  %v989 = vadd.f32 %v920, %v988
  %v990 = vpop.f32.mrf.mxu0
  %991 = vdwg.mxu0
  %v992 = vlaneseq
  %v993 = vand.u32 %v992, 127
  %v994 = vld [vmem:[%s6] sm:$0xff]
  %v995 = vld [vmem:[%s6 + $0x8] sm:$0xff]
  %996 = vset.pattern.permute.xlu0 0
  %997 = vperm.xlu0 %996, %v994
  %v998 = vpop.permute.xlu0 %997
  %999 = vset.pattern.permute.xlu0 0
  %1000 = vperm.xlu0 %999, %v995
  %v1001 = vpop.permute.xlu0 %1000
  %vm1002 = vcmp.eq.s32.totalorder %v993, %v998
  %vm1003 = vcmp.eq.s32.totalorder %v993, %v1001
  %v1004 = vsel %vm1002, 1, 0
  %v1005 = vsel %vm1003, 1, 0
  %v1006 = vcvt.s32.f32 %v1004
  %v1007 = vcvt.s32.f32 %v1005
  %v1008 = vld [vmem:[%s7] sm:$0xff]
  %v1009 = vld [vmem:[%s7 + $0x8] sm:$0xff]
  %v1010 = vld [vmem:[%s7 + $0x10] sm:$0xff]
  %v1011 = vld [vmem:[%s7 + $0x18] sm:$0xff]
  %v1012 = vld [vmem:[%s7 + $0x20] sm:$0xff]
  %v1013 = vld [vmem:[%s7 + $0x28] sm:$0xff]
  %v1014 = vld [vmem:[%s7 + $0x30] sm:$0xff]
  %v1015 = vld [vmem:[%s7 + $0x38] sm:$0xff]
  %v1016 = vld [vmem:[%s7 + $0x40] sm:$0xff]
  %v1017 = vld [vmem:[%s7 + $0x48] sm:$0xff]
  %v1018 = vld [vmem:[%s7 + $0x50] sm:$0xff]
  %v1019 = vld [vmem:[%s7 + $0x58] sm:$0xff]
  %v1020 = vld [vmem:[%s7 + $0x60] sm:$0xff]
  %v1021 = vld [vmem:[%s7 + $0x68] sm:$0xff]
  %v1022 = vld [vmem:[%s7 + $0x70] sm:$0xff]
  %v1023 = vld [vmem:[%s7 + $0x78] sm:$0xff]
  %v1025 = vrot.slane %v989, 6
  %v1027 = vrot.slane %v989, 4
  %v1029 = vrot.slane %v989, 2
  %vm1031 = vcmask 1041408
  %v1032 = vsel %vm1031, %v989, %v1025
  %vm1033 = vcmask 1043456
  %v1034 = vsel %vm1033, %v1032, %v1027
  %vm1035 = vcmask 1045504
  %v1036 = vsel %vm1035, %v1034, %v1029
  %1037 = vmatprep.subr.mxu0 0.0
  %1038 = vmatpush1.msra.mxu0 %v1023
  %1039 = vmatprep.subr.mxu0 0.0
  %1040 = vmatpush1.msra.mxu0 %v1022
  %1041 = vmatprep.subr.mxu0 0.0
  %1042 = vmatpush1.msra.mxu0 %v1021
  %1043 = vmatprep.subr.mxu0 0.0
  %1044 = vmatpush1.msra.mxu0 %v1020
  %1045 = vmatprep.subr.mxu0 0.0
  %1046 = vmatpush1.msra.mxu0 %v1019
  %1047 = vmatprep.subr.mxu0 0.0
  %1048 = vmatpush1.msra.mxu0 %v1018
  %1049 = vmatprep.subr.mxu0 0.0
  %1050 = vmatpush1.msra.mxu0 %v1017
  %1051 = vmatprep.subr.mxu0 0.0
  %1052 = vmatpush1.msra.mxu0 %v1016
  %1053 = vmatprep.subr.mxu0 0.0
  %1054 = vmatpush1.msra.mxu0 %v1015
  %1055 = vmatprep.subr.mxu0 0.0
  %1056 = vmatpush1.msra.mxu0 %v1014
  %1057 = vmatprep.subr.mxu0 0.0
  %1058 = vmatpush1.msra.mxu0 %v1013
  %1059 = vmatprep.subr.mxu0 0.0
  %1060 = vmatpush1.msra.mxu0 %v1012
  %1061 = vmatprep.subr.mxu0 0.0
  %1062 = vmatpush1.msra.mxu0 %v1011
  %1063 = vmatprep.subr.mxu0 0.0
  %1064 = vmatpush1.msra.mxu0 %v1010
  %1065 = vmatprep.subr.mxu0 0.0
  %1066 = vmatpush1.msra.mxu0 %v1009
  %1067 = vmatprep.subr.mxu0 0.0
  %1068 = vmatpush1.msra.mxu0 %v1008
  %1069 = vmatprep.subr.mxu0 0.0
  %1070 = vmatpush2.msra.mxu0 0.0
  %1071 = vmatprep.subr.mxu0 0.0
  %1072 = vmatpush2.msra.mxu0 0.0
  %1073 = vmatprep.subr.mxu0 0.0
  %1074 = vmatpush2.msra.mxu0 0.0
  %1075 = vmatprep.subr.mxu0 0.0
  %1076 = vmatpush2.msra.mxu0 0.0
  %1077 = vmatprep.subr.mxu0 0.0
  %1078 = vmatpush2.msra.mxu0 0.0
  %1079 = vmatprep.subr.mxu0 0.0
  %1080 = vmatpush2.msra.mxu0 0.0
  %1081 = vmatprep.subr.mxu0 0.0
  %1082 = vmatpush2.msra.mxu0 0.0
  %1083 = vmatprep.subr.mxu0 0.0
  %1084 = vmatpush2.msra.mxu0 0.0
  %1085 = vmatprep.subr.mxu0 0.0
  %1086 = vmatpush2.msra.mxu0 0.0
  %1087 = vmatprep.subr.mxu0 0.0
  %1088 = vmatpush2.msra.mxu0 0.0
  %1089 = vmatprep.subr.mxu0 0.0
  %1090 = vmatpush2.msra.mxu0 0.0
  %1091 = vmatprep.subr.mxu0 0.0
  %1092 = vmatpush2.msra.mxu0 0.0
  %1093 = vmatprep.subr.mxu0 0.0
  %1094 = vmatpush2.msra.mxu0 0.0
  %1095 = vmatprep.subr.mxu0 0.0
  %1096 = vmatpush2.msra.mxu0 0.0
  %1097 = vmatprep.subr.mxu0 0.0
  %1098 = vmatpush2.msra.mxu0 0.0
  %1099 = vmatprep.subr.mxu0 0.0
  %1100 = vmatpush2.msra.mxu0 0.0
  %1101 = vmatprep.mubr.f32.mxu0 0.0
  %1102 = vmatmul.mubr.f32.gmra.mxu0 %v1006
  %v1103 = vpop.f32.mrf.mxu0
  %v1104 = vadd.f32 %v1036, %v1103
  %v1105 = vpop.f32.mrf.mxu0
  %1106 = vmatprep.mubr.f32.mxu0 0.0
  %1107 = vmatmul.mubr.f32.gmra.mxu0 %v1007
  %v1108 = vpop.f32.mrf.mxu0
  %v1109 = vadd.f32 %v1036, %v1108
  %v1110 = vpop.f32.mrf.mxu0
  %1111 = vdwg.mxu0
  %v1112 = vld [vmem:[%s8] sm:$0xff]
  %v1113 = vld [vmem:[%s8 + $0x8] sm:$0xff]
  %v1114 = vld [vmem:[%s8 + $0x10] sm:$0xff]
  %v1115 = vld [vmem:[%s8 + $0x18] sm:$0xff]
  %v1117 = vsel %vm286, 0.0, 0
  %1119 = vmatprep.subr.mxu0 0.0
  %1120 = vmatpush1.msra.mxu0 0.0
  %1121 = vmatprep.subr.mxu0 0.0
  %1122 = vmatpush1.msra.mxu0 0.0
  %1123 = vmatprep.subr.mxu0 0.0
  %1124 = vmatpush1.msra.mxu0 0.0
  %1125 = vmatprep.subr.mxu0 0.0
  %1126 = vmatpush1.msra.mxu0 0.0
  %1127 = vmatprep.subr.mxu0 0.0
  %1128 = vmatpush1.msra.mxu0 0.0
  %1129 = vmatprep.subr.mxu0 0.0
  %1130 = vmatpush1.msra.mxu0 0.0
  %1131 = vmatprep.subr.mxu0 0.0
  %1132 = vmatpush1.msra.mxu0 0.0
  %1133 = vmatprep.subr.mxu0 0.0
  %1134 = vmatpush1.msra.mxu0 0.0
  %1135 = vmatprep.subr.mxu0 0.0
  %1136 = vmatpush1.msra.mxu0 0.0
  %1137 = vmatprep.subr.mxu0 0.0
  %1138 = vmatpush1.msra.mxu0 0.0
  %1139 = vmatprep.subr.mxu0 0.0
  %1140 = vmatpush1.msra.mxu0 0.0
  %1141 = vmatprep.subr.mxu0 0.0
  %1142 = vmatpush1.msra.mxu0 0.0
  %1143 = vmatprep.subr.mxu0 0.0
  %1144 = vmatpush1.msra.mxu0 %v1115
  %1145 = vmatprep.subr.mxu0 0.0
  %1146 = vmatpush1.msra.mxu0 %v1114
  %1147 = vmatprep.subr.mxu0 0.0
  %1148 = vmatpush1.msra.mxu0 %v1113
  %1149 = vmatprep.subr.mxu0 0.0
  %1150 = vmatpush1.msra.mxu0 %v1112
  %1151 = vmatprep.subr.mxu0 0.0
  %1152 = vmatpush2.msra.mxu0 0.0
  %1153 = vmatprep.subr.mxu0 0.0
  %1154 = vmatpush2.msra.mxu0 0.0
  %1155 = vmatprep.subr.mxu0 0.0
  %1156 = vmatpush2.msra.mxu0 0.0
  %1157 = vmatprep.subr.mxu0 0.0
  %1158 = vmatpush2.msra.mxu0 0.0
  %1159 = vmatprep.subr.mxu0 0.0
  %1160 = vmatpush2.msra.mxu0 0.0
  %1161 = vmatprep.subr.mxu0 0.0
  %1162 = vmatpush2.msra.mxu0 0.0
  %1163 = vmatprep.subr.mxu0 0.0
  %1164 = vmatpush2.msra.mxu0 0.0
  %1165 = vmatprep.subr.mxu0 0.0
  %1166 = vmatpush2.msra.mxu0 0.0
  %1167 = vmatprep.subr.mxu0 0.0
  %1168 = vmatpush2.msra.mxu0 0.0
  %1169 = vmatprep.subr.mxu0 0.0
  %1170 = vmatpush2.msra.mxu0 0.0
  %1171 = vmatprep.subr.mxu0 0.0
  %1172 = vmatpush2.msra.mxu0 0.0
  %1173 = vmatprep.subr.mxu0 0.0
  %1174 = vmatpush2.msra.mxu0 0.0
  %1175 = vmatprep.subr.mxu0 0.0
  %1176 = vmatpush2.msra.mxu0 0.0
  %1177 = vmatprep.subr.mxu0 0.0
  %1178 = vmatpush2.msra.mxu0 0.0
  %1179 = vmatprep.subr.mxu0 0.0
  %1180 = vmatpush2.msra.mxu0 0.0
  %1181 = vmatprep.subr.mxu0 0.0
  %1182 = vmatpush2.msra.mxu0 0.0
  %1183 = vmatprep.mubr.f32.mxu0 0.0
  %1184 = vmatmul.mubr.f32.gmra.mxu0 %v1117
  %v1185 = vpop.f32.mrf.mxu0
  %v1186 = vadd.f32 0.0, %v1185
  %v1187 = vpop.f32.mrf.mxu0
  %1188 = vdwg.mxu0
  %v1189 = vadd.f32 %v1104, %v1186
  %v1190 = vxor.u32 %v1189, 2147483648
  %v1191 = vmul.f32 %v1190, 1.442695
  %v1192 = vpow.pop %v1191
  %v1193 = vadd.f32 %v1192, 1.0
  %v1194 = vrcp.pop %v1193
  %v1195 = vmul.f32 1.0, %v1194
  %v1196 = vtanh.pop %v1189
  %v1197 = vmul.f32 %v1195, 0.0
  %1199 = vrot.lane.b32.xlu0 %v1196, 32
  %v1200 = vpop.permute.xlu0 %1199
  %v1202 = vmul.f32 %v1195, %v1200
  %1204 = vrot.lane.b32.xlu0 %v1202, 32
  %v1205 = vpop.permute.xlu0 %1204
  %v1207 = vadd.f32 %v1197, %v1205
  %v1208 = vtanh.pop %v1207
  %1210 = vrot.lane.b32.xlu0 %v1208, 32
  %v1211 = vpop.permute.xlu0 %1210
  %v1213 = vmul.f32 %v1195, %v1211
  %1215 = vrot.lane.b32.xlu0 %v1213, 64
  %v1216 = vpop.permute.xlu0 %1215
  %v1217 = vsel %vm286, %v1216, 0
  %1219 = vmatprep.subr.mxu0 0.0
  %1220 = vmatpush1.msra.mxu0 0.0
  %1221 = vmatprep.subr.mxu0 0.0
  %1222 = vmatpush1.msra.mxu0 0.0
  %1223 = vmatprep.subr.mxu0 0.0
  %1224 = vmatpush1.msra.mxu0 0.0
  %1225 = vmatprep.subr.mxu0 0.0
  %1226 = vmatpush1.msra.mxu0 0.0
  %1227 = vmatprep.subr.mxu0 0.0
  %1228 = vmatpush1.msra.mxu0 0.0
  %1229 = vmatprep.subr.mxu0 0.0
  %1230 = vmatpush1.msra.mxu0 0.0
  %1231 = vmatprep.subr.mxu0 0.0
  %1232 = vmatpush1.msra.mxu0 0.0
  %1233 = vmatprep.subr.mxu0 0.0
  %1234 = vmatpush1.msra.mxu0 0.0
  %1235 = vmatprep.subr.mxu0 0.0
  %1236 = vmatpush1.msra.mxu0 0.0
  %1237 = vmatprep.subr.mxu0 0.0
  %1238 = vmatpush1.msra.mxu0 0.0
  %1239 = vmatprep.subr.mxu0 0.0
  %1240 = vmatpush1.msra.mxu0 0.0
  %1241 = vmatprep.subr.mxu0 0.0
  %1242 = vmatpush1.msra.mxu0 0.0
  %1243 = vmatprep.subr.mxu0 0.0
  %1244 = vmatpush1.msra.mxu0 %v1115
  %1245 = vmatprep.subr.mxu0 0.0
  %1246 = vmatpush1.msra.mxu0 %v1114
  %1247 = vmatprep.subr.mxu0 0.0
  %1248 = vmatpush1.msra.mxu0 %v1113
  %1249 = vmatprep.subr.mxu0 0.0
  %1250 = vmatpush1.msra.mxu0 %v1112
  %1251 = vmatprep.subr.mxu0 0.0
  %1252 = vmatpush2.msra.mxu0 0.0
  %1253 = vmatprep.subr.mxu0 0.0
  %1254 = vmatpush2.msra.mxu0 0.0
  %1255 = vmatprep.subr.mxu0 0.0
  %1256 = vmatpush2.msra.mxu0 0.0
  %1257 = vmatprep.subr.mxu0 0.0
  %1258 = vmatpush2.msra.mxu0 0.0
  %1259 = vmatprep.subr.mxu0 0.0
  %1260 = vmatpush2.msra.mxu0 0.0
  %1261 = vmatprep.subr.mxu0 0.0
  %1262 = vmatpush2.msra.mxu0 0.0
  %1263 = vmatprep.subr.mxu0 0.0
  %1264 = vmatpush2.msra.mxu0 0.0
  %1265 = vmatprep.subr.mxu0 0.0
  %1266 = vmatpush2.msra.mxu0 0.0
  %1267 = vmatprep.subr.mxu0 0.0
  %1268 = vmatpush2.msra.mxu0 0.0
  %1269 = vmatprep.subr.mxu0 0.0
  %1270 = vmatpush2.msra.mxu0 0.0
  %1271 = vmatprep.subr.mxu0 0.0
  %1272 = vmatpush2.msra.mxu0 0.0
  %1273 = vmatprep.subr.mxu0 0.0
  %1274 = vmatpush2.msra.mxu0 0.0
  %1275 = vmatprep.subr.mxu0 0.0
  %1276 = vmatpush2.msra.mxu0 0.0
  %1277 = vmatprep.subr.mxu0 0.0
  %1278 = vmatpush2.msra.mxu0 0.0
  %1279 = vmatprep.subr.mxu0 0.0
  %1280 = vmatpush2.msra.mxu0 0.0
  %1281 = vmatprep.subr.mxu0 0.0
  %1282 = vmatpush2.msra.mxu0 0.0
  %1283 = vmatprep.mubr.f32.mxu0 0.0
  %1284 = vmatmul.mubr.f32.gmra.mxu0 %v1217
  %v1285 = vpop.f32.mrf.mxu0
  %v1286 = vadd.f32 0.0, %v1285
  %v1287 = vpop.f32.mrf.mxu0
  %1288 = vdwg.mxu0
  %v1290 = vrot.slane %v1286, 6
  %v1292 = vadd.f32 %v1104, %v1290
  %v1293 = vxor.u32 %v1292, 2147483648
  %v1294 = vmul.f32 %v1293, 1.442695
  %v1295 = vpow.pop %v1294
  %v1296 = vadd.f32 %v1295, 1.0
  %v1297 = vrcp.pop %v1296
  %v1298 = vmul.f32 1.0, %v1297
  %v1299 = vtanh.pop %v1292
  %v1301 = vrot.slane %v1207, 6
  %v1303 = vmul.f32 %v1298, %v1301
  %1305 = vrot.lane.b32.xlu0 %v1299, 32
  %v1306 = vpop.permute.xlu0 %1305
  %v1308 = vmul.f32 %v1298, %v1306
  %1310 = vrot.lane.b32.xlu0 %v1308, 32
  %v1311 = vpop.permute.xlu0 %1310
  %v1313 = vadd.f32 %v1303, %v1311
  %v1314 = vtanh.pop %v1313
  %1316 = vrot.lane.b32.xlu0 %v1314, 32
  %v1317 = vpop.permute.xlu0 %1316
  %v1319 = vmul.f32 %v1298, %v1317
  %v1321 = vrot.slane %v1319, 2
  %1322 = vrot.lane.b32.xlu0 %v1321, 64
  %v1323 = vpop.permute.xlu0 %1322
  %v1324 = vsel %vm286, %v1323, 0
  %1326 = vmatprep.subr.mxu0 0.0
  %1327 = vmatpush1.msra.mxu0 0.0
  %1328 = vmatprep.subr.mxu0 0.0
  %1329 = vmatpush1.msra.mxu0 0.0
  %1330 = vmatprep.subr.mxu0 0.0
  %1331 = vmatpush1.msra.mxu0 0.0
  %1332 = vmatprep.subr.mxu0 0.0
  %1333 = vmatpush1.msra.mxu0 0.0
  %1334 = vmatprep.subr.mxu0 0.0
  %1335 = vmatpush1.msra.mxu0 0.0
  %1336 = vmatprep.subr.mxu0 0.0
  %1337 = vmatpush1.msra.mxu0 0.0
  %1338 = vmatprep.subr.mxu0 0.0
  %1339 = vmatpush1.msra.mxu0 0.0
  %1340 = vmatprep.subr.mxu0 0.0
  %1341 = vmatpush1.msra.mxu0 0.0
  %1342 = vmatprep.subr.mxu0 0.0
  %1343 = vmatpush1.msra.mxu0 0.0
  %1344 = vmatprep.subr.mxu0 0.0
  %1345 = vmatpush1.msra.mxu0 0.0
  %1346 = vmatprep.subr.mxu0 0.0
  %1347 = vmatpush1.msra.mxu0 0.0
  %1348 = vmatprep.subr.mxu0 0.0
  %1349 = vmatpush1.msra.mxu0 0.0
  %1350 = vmatprep.subr.mxu0 0.0
  %1351 = vmatpush1.msra.mxu0 %v1115
  %1352 = vmatprep.subr.mxu0 0.0
  %1353 = vmatpush1.msra.mxu0 %v1114
  %1354 = vmatprep.subr.mxu0 0.0
  %1355 = vmatpush1.msra.mxu0 %v1113
  %1356 = vmatprep.subr.mxu0 0.0
  %1357 = vmatpush1.msra.mxu0 %v1112
  %1358 = vmatprep.subr.mxu0 0.0
  %1359 = vmatpush2.msra.mxu0 0.0
  %1360 = vmatprep.subr.mxu0 0.0
  %1361 = vmatpush2.msra.mxu0 0.0
  %1362 = vmatprep.subr.mxu0 0.0
  %1363 = vmatpush2.msra.mxu0 0.0
  %1364 = vmatprep.subr.mxu0 0.0
  %1365 = vmatpush2.msra.mxu0 0.0
  %1366 = vmatprep.subr.mxu0 0.0
  %1367 = vmatpush2.msra.mxu0 0.0
  %1368 = vmatprep.subr.mxu0 0.0
  %1369 = vmatpush2.msra.mxu0 0.0
  %1370 = vmatprep.subr.mxu0 0.0
  %1371 = vmatpush2.msra.mxu0 0.0
  %1372 = vmatprep.subr.mxu0 0.0
  %1373 = vmatpush2.msra.mxu0 0.0
  %1374 = vmatprep.subr.mxu0 0.0
  %1375 = vmatpush2.msra.mxu0 0.0
  %1376 = vmatprep.subr.mxu0 0.0
  %1377 = vmatpush2.msra.mxu0 0.0
  %1378 = vmatprep.subr.mxu0 0.0
  %1379 = vmatpush2.msra.mxu0 0.0
  %1380 = vmatprep.subr.mxu0 0.0
  %1381 = vmatpush2.msra.mxu0 0.0
  %1382 = vmatprep.subr.mxu0 0.0
  %1383 = vmatpush2.msra.mxu0 0.0
  %1384 = vmatprep.subr.mxu0 0.0
  %1385 = vmatpush2.msra.mxu0 0.0
  %1386 = vmatprep.subr.mxu0 0.0
  %1387 = vmatpush2.msra.mxu0 0.0
  %1388 = vmatprep.subr.mxu0 0.0
  %1389 = vmatpush2.msra.mxu0 0.0
  %1390 = vmatprep.mubr.f32.mxu0 0.0
  %1391 = vmatmul.mubr.f32.gmra.mxu0 %v1324
  %v1392 = vpop.f32.mrf.mxu0
  %v1393 = vadd.f32 0.0, %v1392
  %v1394 = vpop.f32.mrf.mxu0
  %1395 = vdwg.mxu0
  %v1397 = vrot.slane %v1393, 4
  %v1399 = vadd.f32 %v1104, %v1397
  %v1400 = vxor.u32 %v1399, 2147483648
  %v1401 = vmul.f32 %v1400, 1.442695
  %v1402 = vpow.pop %v1401
  %v1403 = vadd.f32 %v1402, 1.0
  %v1404 = vrcp.pop %v1403
  %v1405 = vmul.f32 1.0, %v1404
  %v1406 = vtanh.pop %v1399
  %v1408 = vrot.slane %v1313, 6
  %v1410 = vmul.f32 %v1405, %v1408
  %1412 = vrot.lane.b32.xlu0 %v1406, 32
  %v1413 = vpop.permute.xlu0 %1412
  %v1415 = vmul.f32 %v1405, %v1413
  %1417 = vrot.lane.b32.xlu0 %v1415, 32
  %v1418 = vpop.permute.xlu0 %1417
  %v1420 = vadd.f32 %v1410, %v1418
  %v1421 = vtanh.pop %v1420
  %1423 = vrot.lane.b32.xlu0 %v1421, 32
  %v1424 = vpop.permute.xlu0 %1423
  %v1426 = vmul.f32 %v1405, %v1424
  %v1428 = vrot.slane %v1426, 4
  %1429 = vrot.lane.b32.xlu0 %v1428, 64
  %v1430 = vpop.permute.xlu0 %1429
  %v1431 = vsel %vm286, %v1430, 0
  %1433 = vmatprep.subr.mxu0 0.0
  %1434 = vmatpush1.msra.mxu0 0.0
  %1435 = vmatprep.subr.mxu0 0.0
  %1436 = vmatpush1.msra.mxu0 0.0
  %1437 = vmatprep.subr.mxu0 0.0
  %1438 = vmatpush1.msra.mxu0 0.0
  %1439 = vmatprep.subr.mxu0 0.0
  %1440 = vmatpush1.msra.mxu0 0.0
  %1441 = vmatprep.subr.mxu0 0.0
  %1442 = vmatpush1.msra.mxu0 0.0
  %1443 = vmatprep.subr.mxu0 0.0
  %1444 = vmatpush1.msra.mxu0 0.0
  %1445 = vmatprep.subr.mxu0 0.0
  %1446 = vmatpush1.msra.mxu0 0.0
  %1447 = vmatprep.subr.mxu0 0.0
  %1448 = vmatpush1.msra.mxu0 0.0
  %1449 = vmatprep.subr.mxu0 0.0
  %1450 = vmatpush1.msra.mxu0 0.0
  %1451 = vmatprep.subr.mxu0 0.0
  %1452 = vmatpush1.msra.mxu0 0.0
  %1453 = vmatprep.subr.mxu0 0.0
  %1454 = vmatpush1.msra.mxu0 0.0
  %1455 = vmatprep.subr.mxu0 0.0
  %1456 = vmatpush1.msra.mxu0 0.0
  %1457 = vmatprep.subr.mxu0 0.0
  %1458 = vmatpush1.msra.mxu0 %v1115
  %1459 = vmatprep.subr.mxu0 0.0
  %1460 = vmatpush1.msra.mxu0 %v1114
  %1461 = vmatprep.subr.mxu0 0.0
  %1462 = vmatpush1.msra.mxu0 %v1113
  %1463 = vmatprep.subr.mxu0 0.0
  %1464 = vmatpush1.msra.mxu0 %v1112
  %1465 = vmatprep.subr.mxu0 0.0
  %1466 = vmatpush2.msra.mxu0 0.0
  %1467 = vmatprep.subr.mxu0 0.0
  %1468 = vmatpush2.msra.mxu0 0.0
  %1469 = vmatprep.subr.mxu0 0.0
  %1470 = vmatpush2.msra.mxu0 0.0
  %1471 = vmatprep.subr.mxu0 0.0
  %1472 = vmatpush2.msra.mxu0 0.0
  %1473 = vmatprep.subr.mxu0 0.0
  %1474 = vmatpush2.msra.mxu0 0.0
  %1475 = vmatprep.subr.mxu0 0.0
  %1476 = vmatpush2.msra.mxu0 0.0
  %1477 = vmatprep.subr.mxu0 0.0
  %1478 = vmatpush2.msra.mxu0 0.0
  %1479 = vmatprep.subr.mxu0 0.0
  %1480 = vmatpush2.msra.mxu0 0.0
  %1481 = vmatprep.subr.mxu0 0.0
  %1482 = vmatpush2.msra.mxu0 0.0
  %1483 = vmatprep.subr.mxu0 0.0
  %1484 = vmatpush2.msra.mxu0 0.0
  %1485 = vmatprep.subr.mxu0 0.0
  %1486 = vmatpush2.msra.mxu0 0.0
  %1487 = vmatprep.subr.mxu0 0.0
  %1488 = vmatpush2.msra.mxu0 0.0
  %1489 = vmatprep.subr.mxu0 0.0
  %1490 = vmatpush2.msra.mxu0 0.0
  %1491 = vmatprep.subr.mxu0 0.0
  %1492 = vmatpush2.msra.mxu0 0.0
  %1493 = vmatprep.subr.mxu0 0.0
  %1494 = vmatpush2.msra.mxu0 0.0
  %1495 = vmatprep.subr.mxu0 0.0
  %1496 = vmatpush2.msra.mxu0 0.0
  %1497 = vmatprep.mubr.f32.mxu0 0.0
  %1498 = vmatmul.mubr.f32.gmra.mxu0 %v1431
  %v1499 = vpop.f32.mrf.mxu0
  %v1500 = vadd.f32 0.0, %v1499
  %v1501 = vpop.f32.mrf.mxu0
  %1502 = vdwg.mxu0
  %v1504 = vrot.slane %v1500, 2
  %v1506 = vadd.f32 %v1104, %v1504
  %v1507 = vxor.u32 %v1506, 2147483648
  %v1508 = vmul.f32 %v1507, 1.442695
  %v1509 = vpow.pop %v1508
  %v1510 = vadd.f32 %v1509, 1.0
  %v1511 = vrcp.pop %v1510
  %v1512 = vmul.f32 1.0, %v1511
  %v1513 = vtanh.pop %v1506
  %v1515 = vrot.slane %v1420, 6
  %v1517 = vmul.f32 %v1512, %v1515
  %1519 = vrot.lane.b32.xlu0 %v1513, 32
  %v1520 = vpop.permute.xlu0 %1519
  %v1522 = vmul.f32 %v1512, %v1520
  %1524 = vrot.lane.b32.xlu0 %v1522, 32
  %v1525 = vpop.permute.xlu0 %1524
  %v1527 = vadd.f32 %v1517, %v1525
  %v1528 = vtanh.pop %v1527
  %1530 = vrot.lane.b32.xlu0 %v1528, 32
  %v1531 = vpop.permute.xlu0 %1530
  %v1533 = vmul.f32 %v1512, %v1531
  %v1535 = vrot.slane %v1533, 6
  %1536 = vrot.lane.b32.xlu0 %v1535, 64
  %v1537 = vpop.permute.xlu0 %1536
  %v1538 = vsel %vm286, %v1537, 0
  %1540 = vmatprep.subr.mxu0 0.0
  %1541 = vmatpush1.msra.mxu0 0.0
  %1542 = vmatprep.subr.mxu0 0.0
  %1543 = vmatpush1.msra.mxu0 0.0
  %1544 = vmatprep.subr.mxu0 0.0
  %1545 = vmatpush1.msra.mxu0 0.0
  %1546 = vmatprep.subr.mxu0 0.0
  %1547 = vmatpush1.msra.mxu0 0.0
  %1548 = vmatprep.subr.mxu0 0.0
  %1549 = vmatpush1.msra.mxu0 0.0
  %1550 = vmatprep.subr.mxu0 0.0
  %1551 = vmatpush1.msra.mxu0 0.0
  %1552 = vmatprep.subr.mxu0 0.0
  %1553 = vmatpush1.msra.mxu0 0.0
  %1554 = vmatprep.subr.mxu0 0.0
  %1555 = vmatpush1.msra.mxu0 0.0
  %1556 = vmatprep.subr.mxu0 0.0
  %1557 = vmatpush1.msra.mxu0 0.0
  %1558 = vmatprep.subr.mxu0 0.0
  %1559 = vmatpush1.msra.mxu0 0.0
  %1560 = vmatprep.subr.mxu0 0.0
  %1561 = vmatpush1.msra.mxu0 0.0
  %1562 = vmatprep.subr.mxu0 0.0
  %1563 = vmatpush1.msra.mxu0 0.0
  %1564 = vmatprep.subr.mxu0 0.0
  %1565 = vmatpush1.msra.mxu0 %v1115
  %1566 = vmatprep.subr.mxu0 0.0
  %1567 = vmatpush1.msra.mxu0 %v1114
  %1568 = vmatprep.subr.mxu0 0.0
  %1569 = vmatpush1.msra.mxu0 %v1113
  %1570 = vmatprep.subr.mxu0 0.0
  %1571 = vmatpush1.msra.mxu0 %v1112
  %1572 = vmatprep.subr.mxu0 0.0
  %1573 = vmatpush2.msra.mxu0 0.0
  %1574 = vmatprep.subr.mxu0 0.0
  %1575 = vmatpush2.msra.mxu0 0.0
  %1576 = vmatprep.subr.mxu0 0.0
  %1577 = vmatpush2.msra.mxu0 0.0
  %1578 = vmatprep.subr.mxu0 0.0
  %1579 = vmatpush2.msra.mxu0 0.0
  %1580 = vmatprep.subr.mxu0 0.0
  %1581 = vmatpush2.msra.mxu0 0.0
  %1582 = vmatprep.subr.mxu0 0.0
  %1583 = vmatpush2.msra.mxu0 0.0
  %1584 = vmatprep.subr.mxu0 0.0
  %1585 = vmatpush2.msra.mxu0 0.0
  %1586 = vmatprep.subr.mxu0 0.0
  %1587 = vmatpush2.msra.mxu0 0.0
  %1588 = vmatprep.subr.mxu0 0.0
  %1589 = vmatpush2.msra.mxu0 0.0
  %1590 = vmatprep.subr.mxu0 0.0
  %1591 = vmatpush2.msra.mxu0 0.0
  %1592 = vmatprep.subr.mxu0 0.0
  %1593 = vmatpush2.msra.mxu0 0.0
  %1594 = vmatprep.subr.mxu0 0.0
  %1595 = vmatpush2.msra.mxu0 0.0
  %1596 = vmatprep.subr.mxu0 0.0
  %1597 = vmatpush2.msra.mxu0 0.0
  %1598 = vmatprep.subr.mxu0 0.0
  %1599 = vmatpush2.msra.mxu0 0.0
  %1600 = vmatprep.subr.mxu0 0.0
  %1601 = vmatpush2.msra.mxu0 0.0
  %1602 = vmatprep.subr.mxu0 0.0
  %1603 = vmatpush2.msra.mxu0 0.0
  %1604 = vmatprep.mubr.f32.mxu0 0.0
  %1605 = vmatmul.mubr.f32.gmra.mxu0 %v1538
  %v1606 = vpop.f32.mrf.mxu0
  %v1607 = vadd.f32 0.0, %v1606
  %v1608 = vpop.f32.mrf.mxu0
  %1609 = vdwg.mxu0
  %v1610 = vadd.f32 %v1109, %v1607
  %v1611 = vxor.u32 %v1610, 2147483648
  %v1612 = vmul.f32 %v1611, 1.442695
  %v1613 = vpow.pop %v1612
  %v1614 = vadd.f32 %v1613, 1.0
  %v1615 = vrcp.pop %v1614
  %v1616 = vmul.f32 1.0, %v1615
  %v1617 = vtanh.pop %v1610
  %v1619 = vrot.slane %v1527, 6
  %v1621 = vmul.f32 %v1616, %v1619
  %1623 = vrot.lane.b32.xlu0 %v1617, 32
  %v1624 = vpop.permute.xlu0 %1623
  %v1626 = vmul.f32 %v1616, %v1624
  %1628 = vrot.lane.b32.xlu0 %v1626, 32
  %v1629 = vpop.permute.xlu0 %1628
  %v1631 = vadd.f32 %v1621, %v1629
  %v1632 = vtanh.pop %v1631
  %1634 = vrot.lane.b32.xlu0 %v1632, 32
  %v1635 = vpop.permute.xlu0 %1634
  %v1637 = vmul.f32 %v1616, %v1635
  %1639 = vrot.lane.b32.xlu0 %v1637, 64
  %v1640 = vpop.permute.xlu0 %1639
  %v1641 = vsel %vm286, %v1640, 0
  %1643 = vmatprep.subr.mxu0 0.0
  %1644 = vmatpush1.msra.mxu0 0.0
  %1645 = vmatprep.subr.mxu0 0.0
  %1646 = vmatpush1.msra.mxu0 0.0
  %1647 = vmatprep.subr.mxu0 0.0
  %1648 = vmatpush1.msra.mxu0 0.0
  %1649 = vmatprep.subr.mxu0 0.0
  %1650 = vmatpush1.msra.mxu0 0.0
  %1651 = vmatprep.subr.mxu0 0.0
  %1652 = vmatpush1.msra.mxu0 0.0
  %1653 = vmatprep.subr.mxu0 0.0
  %1654 = vmatpush1.msra.mxu0 0.0
  %1655 = vmatprep.subr.mxu0 0.0
  %1656 = vmatpush1.msra.mxu0 0.0
  %1657 = vmatprep.subr.mxu0 0.0
  %1658 = vmatpush1.msra.mxu0 0.0
  %1659 = vmatprep.subr.mxu0 0.0
  %1660 = vmatpush1.msra.mxu0 0.0
  %1661 = vmatprep.subr.mxu0 0.0
  %1662 = vmatpush1.msra.mxu0 0.0
  %1663 = vmatprep.subr.mxu0 0.0
  %1664 = vmatpush1.msra.mxu0 0.0
  %1665 = vmatprep.subr.mxu0 0.0
  %1666 = vmatpush1.msra.mxu0 0.0
  %1667 = vmatprep.subr.mxu0 0.0
  %1668 = vmatpush1.msra.mxu0 %v1115
  %1669 = vmatprep.subr.mxu0 0.0
  %1670 = vmatpush1.msra.mxu0 %v1114
  %1671 = vmatprep.subr.mxu0 0.0
  %1672 = vmatpush1.msra.mxu0 %v1113
  %1673 = vmatprep.subr.mxu0 0.0
  %1674 = vmatpush1.msra.mxu0 %v1112
  %1675 = vmatprep.subr.mxu0 0.0
  %1676 = vmatpush2.msra.mxu0 0.0
  %1677 = vmatprep.subr.mxu0 0.0
  %1678 = vmatpush2.msra.mxu0 0.0
  %1679 = vmatprep.subr.mxu0 0.0
  %1680 = vmatpush2.msra.mxu0 0.0
  %1681 = vmatprep.subr.mxu0 0.0
  %1682 = vmatpush2.msra.mxu0 0.0
  %1683 = vmatprep.subr.mxu0 0.0
  %1684 = vmatpush2.msra.mxu0 0.0
  %1685 = vmatprep.subr.mxu0 0.0
  %1686 = vmatpush2.msra.mxu0 0.0
  %1687 = vmatprep.subr.mxu0 0.0
  %1688 = vmatpush2.msra.mxu0 0.0
  %1689 = vmatprep.subr.mxu0 0.0
  %1690 = vmatpush2.msra.mxu0 0.0
  %1691 = vmatprep.subr.mxu0 0.0
  %1692 = vmatpush2.msra.mxu0 0.0
  %1693 = vmatprep.subr.mxu0 0.0
  %1694 = vmatpush2.msra.mxu0 0.0
  %1695 = vmatprep.subr.mxu0 0.0
  %1696 = vmatpush2.msra.mxu0 0.0
  %1697 = vmatprep.subr.mxu0 0.0
  %1698 = vmatpush2.msra.mxu0 0.0
  %1699 = vmatprep.subr.mxu0 0.0
  %1700 = vmatpush2.msra.mxu0 0.0
  %1701 = vmatprep.subr.mxu0 0.0
  %1702 = vmatpush2.msra.mxu0 0.0
  %1703 = vmatprep.subr.mxu0 0.0
  %1704 = vmatpush2.msra.mxu0 0.0
  %1705 = vmatprep.subr.mxu0 0.0
  %1706 = vmatpush2.msra.mxu0 0.0
  %1707 = vmatprep.mubr.f32.mxu0 0.0
  %1708 = vmatmul.mubr.f32.gmra.mxu0 %v1641
  %v1709 = vpop.f32.mrf.mxu0
  %v1710 = vadd.f32 0.0, %v1709
  %v1711 = vpop.f32.mrf.mxu0
  %1712 = vdwg.mxu0
  %v1714 = vrot.slane %v1710, 6
  %v1716 = vadd.f32 %v1109, %v1714
  %v1717 = vxor.u32 %v1716, 2147483648
  %v1718 = vmul.f32 %v1717, 1.442695
  %v1719 = vpow.pop %v1718
  %v1720 = vadd.f32 %v1719, 1.0
  %v1721 = vrcp.pop %v1720
  %v1722 = vmul.f32 1.0, %v1721
  %v1723 = vtanh.pop %v1716
  %v1725 = vrot.slane %v1631, 6
  %v1727 = vmul.f32 %v1722, %v1725
  %1729 = vrot.lane.b32.xlu0 %v1723, 32
  %v1730 = vpop.permute.xlu0 %1729
  %v1732 = vmul.f32 %v1722, %v1730
  %1734 = vrot.lane.b32.xlu0 %v1732, 32
  %v1735 = vpop.permute.xlu0 %1734
  %v1737 = vadd.f32 %v1727, %v1735
  %v1738 = vtanh.pop %v1737
  %1740 = vrot.lane.b32.xlu0 %v1738, 32
  %v1741 = vpop.permute.xlu0 %1740
  %v1743 = vmul.f32 %v1722, %v1741
  %v1745 = vrot.slane %v1743, 2
  %1746 = vrot.lane.b32.xlu0 %v1745, 64
  %v1747 = vpop.permute.xlu0 %1746
  %v1748 = vsel %vm286, %v1747, 0
  %1750 = vmatprep.subr.mxu0 0.0
  %1751 = vmatpush1.msra.mxu0 0.0
  %1752 = vmatprep.subr.mxu0 0.0
  %1753 = vmatpush1.msra.mxu0 0.0
  %1754 = vmatprep.subr.mxu0 0.0
  %1755 = vmatpush1.msra.mxu0 0.0
  %1756 = vmatprep.subr.mxu0 0.0
  %1757 = vmatpush1.msra.mxu0 0.0
  %1758 = vmatprep.subr.mxu0 0.0
  %1759 = vmatpush1.msra.mxu0 0.0
  %1760 = vmatprep.subr.mxu0 0.0
  %1761 = vmatpush1.msra.mxu0 0.0
  %1762 = vmatprep.subr.mxu0 0.0
  %1763 = vmatpush1.msra.mxu0 0.0
  %1764 = vmatprep.subr.mxu0 0.0
  %1765 = vmatpush1.msra.mxu0 0.0
  %1766 = vmatprep.subr.mxu0 0.0
  %1767 = vmatpush1.msra.mxu0 0.0
  %1768 = vmatprep.subr.mxu0 0.0
  %1769 = vmatpush1.msra.mxu0 0.0
  %1770 = vmatprep.subr.mxu0 0.0
  %1771 = vmatpush1.msra.mxu0 0.0
  %1772 = vmatprep.subr.mxu0 0.0
  %1773 = vmatpush1.msra.mxu0 0.0
  %1774 = vmatprep.subr.mxu0 0.0
  %1775 = vmatpush1.msra.mxu0 %v1115
  %1776 = vmatprep.subr.mxu0 0.0
  %1777 = vmatpush1.msra.mxu0 %v1114
  %1778 = vmatprep.subr.mxu0 0.0
  %1779 = vmatpush1.msra.mxu0 %v1113
  %1780 = vmatprep.subr.mxu0 0.0
  %1781 = vmatpush1.msra.mxu0 %v1112
  %1782 = vmatprep.subr.mxu0 0.0
  %1783 = vmatpush2.msra.mxu0 0.0
  %1784 = vmatprep.subr.mxu0 0.0
  %1785 = vmatpush2.msra.mxu0 0.0
  %1786 = vmatprep.subr.mxu0 0.0
  %1787 = vmatpush2.msra.mxu0 0.0
  %1788 = vmatprep.subr.mxu0 0.0
  %1789 = vmatpush2.msra.mxu0 0.0
  %1790 = vmatprep.subr.mxu0 0.0
  %1791 = vmatpush2.msra.mxu0 0.0
  %1792 = vmatprep.subr.mxu0 0.0
  %1793 = vmatpush2.msra.mxu0 0.0
  %1794 = vmatprep.subr.mxu0 0.0
  %1795 = vmatpush2.msra.mxu0 0.0
  %1796 = vmatprep.subr.mxu0 0.0
  %1797 = vmatpush2.msra.mxu0 0.0
  %1798 = vmatprep.subr.mxu0 0.0
  %1799 = vmatpush2.msra.mxu0 0.0
  %1800 = vmatprep.subr.mxu0 0.0
  %1801 = vmatpush2.msra.mxu0 0.0
  %1802 = vmatprep.subr.mxu0 0.0
  %1803 = vmatpush2.msra.mxu0 0.0
  %1804 = vmatprep.subr.mxu0 0.0
  %1805 = vmatpush2.msra.mxu0 0.0
  %1806 = vmatprep.subr.mxu0 0.0
  %1807 = vmatpush2.msra.mxu0 0.0
  %1808 = vmatprep.subr.mxu0 0.0
  %1809 = vmatpush2.msra.mxu0 0.0
  %1810 = vmatprep.subr.mxu0 0.0
  %1811 = vmatpush2.msra.mxu0 0.0
  %1812 = vmatprep.subr.mxu0 0.0
  %1813 = vmatpush2.msra.mxu0 0.0
  %1814 = vmatprep.mubr.f32.mxu0 0.0
  %1815 = vmatmul.mubr.f32.gmra.mxu0 %v1748
  %v1816 = vpop.f32.mrf.mxu0
  %v1817 = vadd.f32 0.0, %v1816
  %v1818 = vpop.f32.mrf.mxu0
  %1819 = vdwg.mxu0
  %v1821 = vrot.slane %v1817, 4
  %v1823 = vadd.f32 %v1109, %v1821
  %v1824 = vxor.u32 %v1823, 2147483648
  %v1825 = vmul.f32 %v1824, 1.442695
  %v1826 = vpow.pop %v1825
  %v1827 = vadd.f32 %v1826, 1.0
  %v1828 = vrcp.pop %v1827
  %v1829 = vmul.f32 1.0, %v1828
  %v1830 = vtanh.pop %v1823
  %v1832 = vrot.slane %v1737, 6
  %v1834 = vmul.f32 %v1829, %v1832
  %1836 = vrot.lane.b32.xlu0 %v1830, 32
  %v1837 = vpop.permute.xlu0 %1836
  %v1839 = vmul.f32 %v1829, %v1837
  %1841 = vrot.lane.b32.xlu0 %v1839, 32
  %v1842 = vpop.permute.xlu0 %1841
  %v1844 = vadd.f32 %v1834, %v1842
  %v1845 = vtanh.pop %v1844
  %1847 = vrot.lane.b32.xlu0 %v1845, 32
  %v1848 = vpop.permute.xlu0 %1847
  %v1850 = vmul.f32 %v1829, %v1848
  %v1852 = vrot.slane %v1850, 4
  %1853 = vrot.lane.b32.xlu0 %v1852, 64
  %v1854 = vpop.permute.xlu0 %1853
  %v1855 = vsel %vm286, %v1854, 0
  %1857 = vmatprep.subr.mxu0 0.0
  %1858 = vmatpush1.msra.mxu0 0.0
  %1859 = vmatprep.subr.mxu0 0.0
  %1860 = vmatpush1.msra.mxu0 0.0
  %1861 = vmatprep.subr.mxu0 0.0
  %1862 = vmatpush1.msra.mxu0 0.0
  %1863 = vmatprep.subr.mxu0 0.0
  %1864 = vmatpush1.msra.mxu0 0.0
  %1865 = vmatprep.subr.mxu0 0.0
  %1866 = vmatpush1.msra.mxu0 0.0
  %1867 = vmatprep.subr.mxu0 0.0
  %1868 = vmatpush1.msra.mxu0 0.0
  %1869 = vmatprep.subr.mxu0 0.0
  %1870 = vmatpush1.msra.mxu0 0.0
  %1871 = vmatprep.subr.mxu0 0.0
  %1872 = vmatpush1.msra.mxu0 0.0
  %1873 = vmatprep.subr.mxu0 0.0
  %1874 = vmatpush1.msra.mxu0 0.0
  %1875 = vmatprep.subr.mxu0 0.0
  %1876 = vmatpush1.msra.mxu0 0.0
  %1877 = vmatprep.subr.mxu0 0.0
  %1878 = vmatpush1.msra.mxu0 0.0
  %1879 = vmatprep.subr.mxu0 0.0
  %1880 = vmatpush1.msra.mxu0 0.0
  %1881 = vmatprep.subr.mxu0 0.0
  %1882 = vmatpush1.msra.mxu0 %v1115
  %1883 = vmatprep.subr.mxu0 0.0
  %1884 = vmatpush1.msra.mxu0 %v1114
  %1885 = vmatprep.subr.mxu0 0.0
  %1886 = vmatpush1.msra.mxu0 %v1113
  %1887 = vmatprep.subr.mxu0 0.0
  %1888 = vmatpush1.msra.mxu0 %v1112
  %1889 = vmatprep.subr.mxu0 0.0
  %1890 = vmatpush2.msra.mxu0 0.0
  %1891 = vmatprep.subr.mxu0 0.0
  %1892 = vmatpush2.msra.mxu0 0.0
  %1893 = vmatprep.subr.mxu0 0.0
  %1894 = vmatpush2.msra.mxu0 0.0
  %1895 = vmatprep.subr.mxu0 0.0
  %1896 = vmatpush2.msra.mxu0 0.0
  %1897 = vmatprep.subr.mxu0 0.0
  %1898 = vmatpush2.msra.mxu0 0.0
  %1899 = vmatprep.subr.mxu0 0.0
  %1900 = vmatpush2.msra.mxu0 0.0
  %1901 = vmatprep.subr.mxu0 0.0
  %1902 = vmatpush2.msra.mxu0 0.0
  %1903 = vmatprep.subr.mxu0 0.0
  %1904 = vmatpush2.msra.mxu0 0.0
  %1905 = vmatprep.subr.mxu0 0.0
  %1906 = vmatpush2.msra.mxu0 0.0
  %1907 = vmatprep.subr.mxu0 0.0
  %1908 = vmatpush2.msra.mxu0 0.0
  %1909 = vmatprep.subr.mxu0 0.0
  %1910 = vmatpush2.msra.mxu0 0.0
  %1911 = vmatprep.subr.mxu0 0.0
  %1912 = vmatpush2.msra.mxu0 0.0
  %1913 = vmatprep.subr.mxu0 0.0
  %1914 = vmatpush2.msra.mxu0 0.0
  %1915 = vmatprep.subr.mxu0 0.0
  %1916 = vmatpush2.msra.mxu0 0.0
  %1917 = vmatprep.subr.mxu0 0.0
  %1918 = vmatpush2.msra.mxu0 0.0
  %1919 = vmatprep.subr.mxu0 0.0
  %1920 = vmatpush2.msra.mxu0 0.0
  %1921 = vmatprep.mubr.f32.mxu0 0.0
  %1922 = vmatmul.mubr.f32.gmra.mxu0 %v1855
  %v1923 = vpop.f32.mrf.mxu0
  %v1924 = vadd.f32 0.0, %v1923
  %v1925 = vpop.f32.mrf.mxu0
  %1926 = vdwg.mxu0
  %v1928 = vrot.slane %v1924, 2
  %v1930 = vadd.f32 %v1109, %v1928
  %v1931 = vxor.u32 %v1930, 2147483648
  %v1932 = vmul.f32 %v1931, 1.442695
  %v1933 = vpow.pop %v1932
  %v1934 = vadd.f32 %v1933, 1.0
  %v1935 = vrcp.pop %v1934
  %v1936 = vmul.f32 1.0, %v1935
  %v1937 = vtanh.pop %v1930
  %v1939 = vrot.slane %v1844, 6
  %v1941 = vmul.f32 %v1936, %v1939
  %1943 = vrot.lane.b32.xlu0 %v1937, 32
  %v1944 = vpop.permute.xlu0 %1943
  %v1946 = vmul.f32 %v1936, %v1944
  %1948 = vrot.lane.b32.xlu0 %v1946, 32
  %v1949 = vpop.permute.xlu0 %1948
  %v1951 = vadd.f32 %v1941, %v1949
  %v1952 = vtanh.pop %v1951
  %1954 = vrot.lane.b32.xlu0 %v1952, 32
  %v1955 = vpop.permute.xlu0 %1954
  %v1957 = vmul.f32 %v1936, %v1955
  %v1958 = vsel %vm1031, %v1213, %v1319
  %v1959 = vsel %vm1033, %v1958, %v1426
  %v1960 = vsel %vm1035, %v1959, %v1533
  %v1961 = vsel %vm1031, %v1637, %v1743
  %v1962 = vsel %vm1033, %v1961, %v1850
  %v1963 = vsel %vm1035, %v1962, %v1957
  %v1964 = vld [vmem:[%s9] sm:$0xff]
  %v1965 = vld [vmem:[%s9 + $0x8] sm:$0xff]
  %v1966 = vld [vmem:[%s9 + $0x10] sm:$0xff]
  %v1967 = vld [vmem:[%s9 + $0x18] sm:$0xff]
  %v1968 = vld [vmem:[%s10] sm:$0x1]
  %v1970 = vlaneseq
  %v1971 = vshrl.u32 %v1970, 7
  %v1972 = vsub.s32 0, %v1971
  %v1973 = vrot.slane %v1968, %v1972
  %1977 = vrot.lane.b32.xlu0 %v1960, 64
  %v1978 = vpop.permute.xlu0 %1977
  %1979 = vrot.lane.b32.xlu0 %v1963, 64
  %v1980 = vpop.permute.xlu0 %1979
  %v1981 = vsel %vm286, %v1978, 0
  %v1983 = vsel %vm286, %v1980, 0
  %1985 = vmatprep.subr.mxu0 0.0
  %1986 = vmatpush1.msra.mxu0 0.0
  %1987 = vmatprep.subr.mxu0 0.0
  %1988 = vmatpush1.msra.mxu0 0.0
  %1989 = vmatprep.subr.mxu0 0.0
  %1990 = vmatpush1.msra.mxu0 0.0
  %1991 = vmatprep.subr.mxu0 0.0
  %1992 = vmatpush1.msra.mxu0 0.0
  %1993 = vmatprep.subr.mxu0 0.0
  %1994 = vmatpush1.msra.mxu0 0.0
  %1995 = vmatprep.subr.mxu0 0.0
  %1996 = vmatpush1.msra.mxu0 0.0
  %1997 = vmatprep.subr.mxu0 0.0
  %1998 = vmatpush1.msra.mxu0 0.0
  %1999 = vmatprep.subr.mxu0 0.0
  %2000 = vmatpush1.msra.mxu0 0.0
  %2001 = vmatprep.subr.mxu0 0.0
  %2002 = vmatpush1.msra.mxu0 0.0
  %2003 = vmatprep.subr.mxu0 0.0
  %2004 = vmatpush1.msra.mxu0 0.0
  %2005 = vmatprep.subr.mxu0 0.0
  %2006 = vmatpush1.msra.mxu0 0.0
  %2007 = vmatprep.subr.mxu0 0.0
  %2008 = vmatpush1.msra.mxu0 0.0
  %2009 = vmatprep.subr.mxu0 0.0
  %2010 = vmatpush1.msra.mxu0 %v1967
  %2011 = vmatprep.subr.mxu0 0.0
  %2012 = vmatpush1.msra.mxu0 %v1966
  %2013 = vmatprep.subr.mxu0 0.0
  %2014 = vmatpush1.msra.mxu0 %v1965
  %2015 = vmatprep.subr.mxu0 0.0
  %2016 = vmatpush1.msra.mxu0 %v1964
  %2017 = vmatprep.subr.mxu0 0.0
  %2018 = vmatpush2.msra.mxu0 0.0
  %2019 = vmatprep.subr.mxu0 0.0
  %2020 = vmatpush2.msra.mxu0 0.0
  %2021 = vmatprep.subr.mxu0 0.0
  %2022 = vmatpush2.msra.mxu0 0.0
  %2023 = vmatprep.subr.mxu0 0.0
  %2024 = vmatpush2.msra.mxu0 0.0
  %2025 = vmatprep.subr.mxu0 0.0
  %2026 = vmatpush2.msra.mxu0 0.0
  %2027 = vmatprep.subr.mxu0 0.0
  %2028 = vmatpush2.msra.mxu0 0.0
  %2029 = vmatprep.subr.mxu0 0.0
  %2030 = vmatpush2.msra.mxu0 0.0
  %2031 = vmatprep.subr.mxu0 0.0
  %2032 = vmatpush2.msra.mxu0 0.0
  %2033 = vmatprep.subr.mxu0 0.0
  %2034 = vmatpush2.msra.mxu0 0.0
  %2035 = vmatprep.subr.mxu0 0.0
  %2036 = vmatpush2.msra.mxu0 0.0
  %2037 = vmatprep.subr.mxu0 0.0
  %2038 = vmatpush2.msra.mxu0 0.0
  %2039 = vmatprep.subr.mxu0 0.0
  %2040 = vmatpush2.msra.mxu0 0.0
  %2041 = vmatprep.subr.mxu0 0.0
  %2042 = vmatpush2.msra.mxu0 0.0
  %2043 = vmatprep.subr.mxu0 0.0
  %2044 = vmatpush2.msra.mxu0 0.0
  %2045 = vmatprep.subr.mxu0 0.0
  %2046 = vmatpush2.msra.mxu0 0.0
  %2047 = vmatprep.subr.mxu0 0.0
  %2048 = vmatpush2.msra.mxu0 0.0
  %2049 = vmatprep.mubr.f32.mxu0 0.0
  %2050 = vmatmul.mubr.f32.gmra.mxu0 %v1981
  %v2051 = vpop.f32.mrf.mxu0
  %v2052 = vadd.f32 %v1973, %v2051
  %v2053 = vpop.f32.mrf.mxu0
  %2054 = vmatprep.mubr.f32.mxu0 0.0
  %2055 = vmatmul.mubr.f32.gmra.mxu0 %v1983
  %v2056 = vpop.f32.mrf.mxu0
  %v2057 = vadd.f32 %v1973, %v2056
  %v2058 = vpop.f32.mrf.mxu0
  %2059 = vdwg.mxu0
  %2060 = vst [vmem:[%s11] sm:$0xff] %v2052
  %2061 = vst [vmem:[%s11 + $0x8] sm:$0xff] %v2057
  // Predicated region
  $region46: #{image_captioning_forward.1} parent=0 // pred_check
    _
  $region47: #{image_captioning_forward.1} parent=0 // pred_check_branch
    %2063 = sbr.rel (0) target = $region49
  $region48: #{image_captioning_forward.1} parent=0 // pred_region
    _
  $region49: #{image_captioning_forward.1} parent=0 // pred_fallthru
    _
  // Predicated region
  $region50: #{image_captioning_forward.1} parent=0 // pred_check
    _
  $region51: #{image_captioning_forward.1} parent=0 // pred_check_branch
    %2065 = sbr.rel (0) target = $region53
  $region52: #{image_captioning_forward.1} parent=0 // pred_region
    _
  $region53: #{image_captioning_forward.1} parent=0 // pred_fallthru
    _

</llo_original>
